<compile_context>
chip_gen: v7x
topology: tpu7x:2x2x1
jax: 0.10.0
libtpu: 0.0.40
codegen_flags: <defaults>
</compile_context>

<pallas_src>
import math

import jax
import jax.numpy as jnp
from jax.experimental import pallas as pl
from jax.experimental.pallas import tpu as pltpu


def _softplus(x):
    # numerically stable softplus; identical formula in kernel and reference
    return jnp.maximum(x, 0.0) + jnp.log(1.0 + jnp.exp(-jnp.abs(x)))


def _silu(x):
    # tanh-based sigmoid: lowers cleanly in Mosaic and maps onto the EUP
    return x * (0.5 * (jnp.tanh(0.5 * x) + 1.0))


def _mamba_kernel(h_ref, win_ref, convw_ref, convb_ref, wx_ref, wdt_ref,
                  dtb_ref, a_ref, d_ref, wout_ref, o_ref):
    Bt, L, d_model = h_ref.shape
    d_state, d_inner = a_ref.shape
    d_conv = convw_ref.shape[0]
    dt_rank = wdt_ref.shape[0]
    f32, bf16 = jnp.float32, jnp.bfloat16

    # ---- fused in_proj (bias=False): one (Bt*L, d_model) x (d_model, 2*d_inner)
    h2 = h_ref[...].reshape(Bt * L, d_model).astype(bf16)
    xz = jnp.dot(h2, win_ref[...], preferred_element_type=f32)     # (Bt*L, 2*d_inner)
    x2 = xz[:, :d_inner]                                           # x branch
    z2 = xz[:, d_inner:]                                           # z (gate) branch

    # ---- causal depthwise conv1d along L + SiLU (pure VPU, f32) -------------
    x3 = x2.reshape(Bt, L, d_inner)
    xpad = jnp.concatenate(
        [jnp.zeros((Bt, d_conv - 1, d_inner), f32), x3], axis=1)   # left zero-pad
    conv = jnp.zeros((Bt, L, d_inner), f32)
    for k in range(d_conv):                                        # static & small
        conv = conv + xpad[:, k:k + L, :] * convw_ref[k:k + 1, :]
    u3 = _silu(conv + convb_ref[...])                              # (Bt, L, d_inner)
    u2 = u3.reshape(Bt * L, d_inner)

    # ---- fused x_proj -> [dt_low | B | C]; dt_proj (bias in softplus) -------
    u16 = u2.astype(bf16)
    x_dbl = jnp.dot(u16, wx_ref[...], preferred_element_type=f32)  # (Bt*L, dt_rank+2*d_state)
    dt_low = x_dbl[:, :dt_rank]
    bmat = x_dbl[:, dt_rank:dt_rank + d_state]                     # (Bt*L, d_state)
    cmat = x_dbl[:, dt_rank + d_state:]                            # (Bt*L, d_state)
    dt = jnp.dot(dt_low.astype(bf16), wdt_ref[...],
                 preferred_element_type=f32)                       # (Bt*L, d_inner)
    delta2 = _softplus(dt + dtb_ref[...])
    du2 = delta2 * u2

    # ---- selective scan prep: everything f32, off the serial critical path --
    delta3 = delta2.reshape(Bt, L, d_inner)
    du3 = du2.reshape(Bt, L, d_inner)
    # transpose B / C once so per-step columns are already sublane-oriented
    bmat_t = jnp.transpose(bmat.reshape(Bt, L, d_state), (0, 2, 1))  # (Bt, d_state, L)
    cmat_t = jnp.transpose(cmat.reshape(Bt, L, d_state), (0, 2, 1))  # (Bt, d_state, L)
    a_t = a_ref[...]                                                 # (d_state, d_inner) = -exp(A_log)^T
    # precompute exp(delta * A) for the whole tile (EUP pipelines ahead of scan)
    da_all = jnp.exp(delta3[:, :, None, :] * a_t[None, None, :, :])  # (Bt, L, d_state, d_inner)

    # ---- selective scan: sequential recurrence over L (VPU/XLU only) --------
    state = jnp.zeros((Bt, d_state, d_inner), f32)
    ys = []
    for l in range(L):                      # L static & small -> fully unrolled
        dbu = bmat_t[:, :, l:l + 1] * du3[:, l:l + 1, :]        # outer product (VPU)
        state = da_all[:, l] * state + dbu
        ys.append(jnp.sum(cmat_t[:, :, l:l + 1] * state,
                          axis=1, keepdims=True))               # sublane reduce (XLU)
    y2 = jnp.concatenate(ys, axis=1).reshape(Bt * L, d_inner)

    # ---- skip connection (D), SiLU(z) gate, out_proj ------------------------
    y2 = (y2 + u2 * d_ref[...]) * _silu(z2)
    out = jnp.dot(y2.astype(bf16), wout_ref[...], preferred_element_type=f32)
    o_ref[...] = out.reshape(Bt, L, d_model).astype(o_ref.dtype)


def prepare_params(params):
    """One-time weight preprocessing: transposes / casts / -exp(A_log)."""
    d_inner, d_state = params["A_log"].shape
    d_conv = params["conv_w"].shape[-1]
    f32, bf16 = jnp.float32, jnp.bfloat16
    return {
        "w_in": jnp.transpose(params["in_w"]).astype(bf16),            # (d_model, 2*d_inner)
        "conv_w": jnp.transpose(params["conv_w"].reshape(d_inner, d_conv)).astype(f32),
        "conv_b": params["conv_b"].reshape(1, d_inner).astype(f32),
        "w_x": jnp.transpose(params["x_w"]).astype(bf16),              # (d_inner, dt_rank+2*d_state)
        "w_dt": jnp.transpose(params["dt_w"]).astype(bf16),            # (dt_rank, d_inner)
        "dt_b": params["dt_b"].reshape(1, d_inner).astype(f32),
        "neg_a_t": jnp.transpose(-jnp.exp(params["A_log"].astype(f32))),  # (d_state, d_inner)
        "d": params["D"].reshape(1, d_inner).astype(f32),
        "w_out": jnp.transpose(params["out_w"]).astype(bf16),          # (d_inner, d_model)
    }


def mamba_forward(hidden_states, prep):
    """hidden_states: (batch, L, d_model) f32.  prep: prepare_params output."""
    batch, L, d_model = hidden_states.shape
    d_state, d_inner = prep["neg_a_t"].shape
    d_conv = prep["conv_w"].shape[0]
    dt_rank = prep["w_dt"].shape[0]

    # batch tile: aim for ~256 matmul rows per grid step, while dividing batch
    bt = max(1, min(batch, max(1, 256 // L)))
    while batch % bt:
        bt -= 1

    const2 = lambda b: (0, 0)
    out = pl.pallas_call(
        _mamba_kernel,
        out_shape=jax.ShapeDtypeStruct((batch, L, d_model), hidden_states.dtype),
        grid_spec=pltpu.PrefetchScalarGridSpec(
            num_scalar_prefetch=0,
            grid=(batch // bt,),
            in_specs=[
                pl.BlockSpec((bt, L, d_model), lambda b: (b, 0, 0)),        # hidden states
                pl.BlockSpec((d_model, 2 * d_inner), const2),               # in_proj weight^T (fused x|z)
                pl.BlockSpec((d_conv, d_inner), const2),                    # conv1d weight
                pl.BlockSpec((1, d_inner), const2),                         # conv1d bias
                pl.BlockSpec((d_inner, dt_rank + 2 * d_state), const2),     # x_proj weight^T (fused dt|B|C)
                pl.BlockSpec((dt_rank, d_inner), const2),                   # dt_proj weight^T
                pl.BlockSpec((1, d_inner), const2),                         # dt_proj bias
                pl.BlockSpec((d_state, d_inner), const2),                   # -exp(A_log)^T
                pl.BlockSpec((1, d_inner), const2),                         # D
                pl.BlockSpec((d_inner, d_model), const2),                   # out_proj weight^T
            ],
            out_specs=pl.BlockSpec((bt, L, d_model), lambda b: (b, 0, 0)),
        ),
        compiler_params=pltpu.CompilerParams(
            dimension_semantics=("parallel",),
            vmem_limit_bytes=64 * 1024 * 1024),
    )(hidden_states, prep["w_in"], prep["conv_w"], prep["conv_b"],
      prep["w_x"], prep["w_dt"], prep["dt_b"], prep["neg_a_t"],
      prep["d"], prep["w_out"])
    return out


def mamba_reference(hidden_states, params):
    """Pure-JAX reference mirroring the kernel's precision choices."""
    batch, L, d_model = hidden_states.shape
    d_inner, d_state = params["A_log"].shape
    d_conv = params["conv_w"].shape[-1]
    dt_rank = params["dt_w"].shape[1]
    f32, bf16 = jnp.float32, jnp.bfloat16
    b16 = lambda t: t.astype(bf16)

    w_in = params["in_w"].T
    conv_w = params["conv_w"].reshape(d_inner, d_conv).T
    conv_b = params["conv_b"]
    w_x = params["x_w"].T
    w_dt = params["dt_w"].T
    dt_b = params["dt_b"]
    A = -jnp.exp(params["A_log"])
    d_vec = params["D"]
    w_out = params["out_w"].T

    h2 = hidden_states.reshape(batch * L, d_model)
    xz = jnp.dot(b16(h2), b16(w_in), preferred_element_type=f32)
    x = xz[:, :d_inner].reshape(batch, L, d_inner)
    z = xz[:, d_inner:]

    xpad = jnp.pad(x, ((0, 0), (d_conv - 1, 0), (0, 0)))
    conv = jnp.zeros_like(x)
    for k in range(d_conv):
        conv = conv + xpad[:, k:k + L, :] * conv_w[k][None, None, :]
    u = _silu(conv + conv_b[None, None, :])                        # (batch, L, d_inner)
    u2 = u.reshape(batch * L, d_inner)

    x_dbl = jnp.dot(b16(u2), b16(w_x), preferred_element_type=f32)
    dt_low = x_dbl[:, :dt_rank]
    bmat = x_dbl[:, dt_rank:dt_rank + d_state].reshape(batch, L, d_state)
    cmat = x_dbl[:, dt_rank + d_state:].reshape(batch, L, d_state)
    dt = jnp.dot(b16(dt_low), b16(w_dt), preferred_element_type=f32)
    delta = _softplus(dt + dt_b[None, :]).reshape(batch, L, d_inner)
    du = delta * u

    state = jnp.zeros((batch, d_state, d_inner), f32)
    ys = []
    for l in range(L):
        da = jnp.exp(delta[:, l, None, :] * A.T[None, :, :])
        dbu = bmat[:, l, :, None] * du[:, l, None, :]
        state = da * state + dbu
        ys.append(jnp.sum(cmat[:, l, :, None] * state, axis=1))
    y = jnp.stack(ys, axis=1).reshape(batch * L, d_inner)
    y = (y + u2 * d_vec[None, :]) * _silu(z)
    out = jnp.dot(b16(y), b16(w_out), preferred_element_type=f32)
    return out.reshape(batch, L, d_model).astype(hidden_states.dtype)


if __name__ == "__main__":
    # Small shapes consistent with the module: d_model=32 -> d_inner=64,
    # d_state=16, d_conv=4, dt_rank=ceil(32/16)=2; batch=2, seqlen=8.
    d_model, d_state, d_conv, expand = 32, 16, 4, 2
    d_inner = expand * d_model
    dt_rank = math.ceil(d_model / 16)
    batch, seqlen = 2, 8

    key = jax.random.PRNGKey(0)
    keys = jax.random.split(key, 8)

    lim_in = 1.0 / math.sqrt(d_model)
    lim_x = 1.0 / math.sqrt(d_inner)
    lim_c = 1.0 / math.sqrt(d_conv)
    dt_std = dt_rank ** -0.5

    # dt_proj bias init (same recipe as the PyTorch module)
    dt_min, dt_max, dt_floor = 1e-3, 1e-1, 1e-4
    dt0 = jnp.exp(jax.random.uniform(keys[5], (d_inner,), jnp.float32)
                  * (math.log(dt_max) - math.log(dt_min)) + math.log(dt_min))
    dt0 = jnp.maximum(dt0, dt_floor)
    inv_dt = dt0 + jnp.log(-jnp.expm1(-dt0))

    params = {
        "in_w": jax.random.uniform(keys[0], (2 * d_inner, d_model), jnp.float32, -lim_in, lim_in),
        "conv_w": jax.random.uniform(keys[1], (d_inner, 1, d_conv), jnp.float32, -lim_c, lim_c),
        "conv_b": jax.random.uniform(keys[2], (d_inner,), jnp.float32, -lim_c, lim_c),
        "x_w": jax.random.uniform(keys[3], (dt_rank + 2 * d_state, d_inner), jnp.float32, -lim_x, lim_x),
        "dt_w": jax.random.uniform(keys[4], (d_inner, dt_rank), jnp.float32, -dt_std, dt_std),
        "dt_b": inv_dt,
        "A_log": jnp.log(jnp.broadcast_to(
            jnp.arange(1, d_state + 1, dtype=jnp.float32), (d_inner, d_state))),
        "D": jnp.ones((d_inner,), jnp.float32),
        "out_w": jax.random.uniform(keys[6], (d_model, d_inner), jnp.float32, -lim_x, lim_x),
    }
    hidden = jax.random.normal(keys[7], (batch, seqlen, d_model), jnp.float32)

    prep = prepare_params(params)                 # weight prep paid once
    out = jax.jit(mamba_forward)(hidden, prep)
    out = jax.block_until_ready(out)

    ref = mamba_reference(hidden, params)
    assert out.shape == (batch, seqlen, d_model)
    err = float(jnp.max(jnp.abs(out - ref)))
    assert jnp.allclose(out, ref, atol=2e-3, rtol=2e-3), \
        f"mismatch vs reference (max abs err {err})"
    print("KERNEL_OK")
</pallas_src>

<mosaic_0001>
module attributes {stable_mosaic.version = 11 : i64} {
  func.func @_mamba_kernel(%arg0: i32, %arg1: memref<2x8x32xf32, #tpu.memory_space<vmem>>, %arg2: memref<32x128xbf16, #tpu.memory_space<vmem>>, %arg3: memref<4x64xf32, #tpu.memory_space<vmem>>, %arg4: memref<1x64xf32, #tpu.memory_space<vmem>>, %arg5: memref<64x34xbf16, #tpu.memory_space<vmem>>, %arg6: memref<2x64xbf16, #tpu.memory_space<vmem>>, %arg7: memref<1x64xf32, #tpu.memory_space<vmem>>, %arg8: memref<16x64xf32, #tpu.memory_space<vmem>>, %arg9: memref<1x64xf32, #tpu.memory_space<vmem>>, %arg10: memref<64x32xbf16, #tpu.memory_space<vmem>>, %arg11: memref<2x8x32xf32, #tpu.memory_space<vmem>>) attributes {dimension_semantics = [#tpu.dimension_semantics<parallel>], iteration_bounds = array<i64: 1>, scalar_prefetch = 0 : i64, scratch_operands = 0 : i64, tpu.core_type = #tpu.core_type<tc>, window_params = [{transform_indices = @transform_0, window_bounds = array<i64: 2, 8, 32>}, {pipeline_mode = #tpu.pipeline_mode<synchronous>, transform_indices = @transform_1, window_bounds = array<i64: 32, 128>}, {pipeline_mode = #tpu.pipeline_mode<synchronous>, transform_indices = @transform_2, window_bounds = array<i64: 4, 64>}, {pipeline_mode = #tpu.pipeline_mode<synchronous>, transform_indices = @transform_3, window_bounds = array<i64: 1, 64>}, {pipeline_mode = #tpu.pipeline_mode<synchronous>, transform_indices = @transform_4, window_bounds = array<i64: 64, 34>}, {pipeline_mode = #tpu.pipeline_mode<synchronous>, transform_indices = @transform_5, window_bounds = array<i64: 2, 64>}, {pipeline_mode = #tpu.pipeline_mode<synchronous>, transform_indices = @transform_6, window_bounds = array<i64: 1, 64>}, {pipeline_mode = #tpu.pipeline_mode<synchronous>, transform_indices = @transform_7, window_bounds = array<i64: 16, 64>}, {pipeline_mode = #tpu.pipeline_mode<synchronous>, transform_indices = @transform_8, window_bounds = array<i64: 1, 64>}, {pipeline_mode = #tpu.pipeline_mode<synchronous>, transform_indices = @transform_9, window_bounds = array<i64: 64, 32>}, {transform_indices = @transform_10, window_bounds = array<i64: 2, 8, 32>}]} {
    %c0 = arith.constant 0 : index
    %c0_0 = arith.constant 0 : index
    %c0_1 = arith.constant 0 : index
    %0 = vector.load %arg1[%c0, %c0_0, %c0_1] : memref<2x8x32xf32, #tpu.memory_space<vmem>>, vector<2x8x32xf32>
    %1 = vector.shape_cast %0 : vector<2x8x32xf32> to vector<16x32xf32>
    %2 = arith.truncf %1 : vector<16x32xf32> to vector<16x32xbf16>
    %c0_2 = arith.constant 0 : index
    %c0_3 = arith.constant 0 : index
    %3 = vector.load %arg2[%c0_2, %c0_3] : memref<32x128xbf16, #tpu.memory_space<vmem>>, vector<32x128xbf16>
    %cst = arith.constant dense<0.000000e+00> : vector<16x128xf32>
    %4 = tpu.matmul %2, %3, %cst {dimension_numbers = #tpu.dot_dimension_numbers<[1], [0], [0], [1], [0, 0, 1, 1], [], []>} : vector<16x32xbf16>, vector<32x128xbf16>, vector<16x128xf32> -> vector<16x128xf32>
    %5 = vector.extract_strided_slice %4 {offsets = [0, 0], sizes = [16, 64], strides = [1, 1]} : vector<16x128xf32> to vector<16x64xf32>
    %6 = vector.extract_strided_slice %4 {offsets = [0, 64], sizes = [16, 64], strides = [1, 1]} : vector<16x128xf32> to vector<16x64xf32>
    %7 = vector.shape_cast %5 : vector<16x64xf32> to vector<2x8x64xf32>
    %cst_4 = arith.constant 0.000000e+00 : f32
    %8 = vector.broadcast %cst_4 : f32 to vector<2x3x64xf32>
    %9 = tpu.concatenate %8, %7 in 1 : vector<2x3x64xf32>, vector<2x8x64xf32> -> vector<2x11x64xf32>
    %cst_5 = arith.constant 0.000000e+00 : f32
    %10 = vector.broadcast %cst_5 : f32 to vector<2x8x64xf32>
    %11 = vector.extract_strided_slice %9 {offsets = [0, 0, 0], sizes = [2, 8, 64], strides = [1, 1, 1]} : vector<2x11x64xf32> to vector<2x8x64xf32>
    %c0_6 = arith.constant 0 : index
    %c0_7 = arith.constant 0 : index
    %12 = vector.load %arg3[%c0_6, %c0_7] : memref<4x64xf32, #tpu.memory_space<vmem>>, vector<1x64xf32>
    %13 = vector.shape_cast %12 : vector<1x64xf32> to vector<1x1x64xf32>
    %14 = vector.broadcast %13 : vector<1x1x64xf32> to vector<2x8x64xf32>
    %15 = arith.mulf %11, %14 : vector<2x8x64xf32>
    %16 = arith.addf %10, %15 : vector<2x8x64xf32>
    %17 = vector.extract_strided_slice %9 {offsets = [0, 1, 0], sizes = [2, 8, 64], strides = [1, 1, 1]} : vector<2x11x64xf32> to vector<2x8x64xf32>
    %c1 = arith.constant 1 : index
    %c0_8 = arith.constant 0 : index
    %18 = vector.load %arg3[%c1, %c0_8] : memref<4x64xf32, #tpu.memory_space<vmem>>, vector<1x64xf32>
    %19 = vector.shape_cast %18 : vector<1x64xf32> to vector<1x1x64xf32>
    %20 = vector.broadcast %19 : vector<1x1x64xf32> to vector<2x8x64xf32>
    %21 = arith.mulf %17, %20 : vector<2x8x64xf32>
    %22 = arith.addf %16, %21 : vector<2x8x64xf32>
    %23 = vector.extract_strided_slice %9 {offsets = [0, 2, 0], sizes = [2, 8, 64], strides = [1, 1, 1]} : vector<2x11x64xf32> to vector<2x8x64xf32>
    %c2 = arith.constant 2 : index
    %c0_9 = arith.constant 0 : index
    %24 = vector.load %arg3[%c2, %c0_9] : memref<4x64xf32, #tpu.memory_space<vmem>>, vector<1x64xf32>
    %25 = vector.shape_cast %24 : vector<1x64xf32> to vector<1x1x64xf32>
    %26 = vector.broadcast %25 : vector<1x1x64xf32> to vector<2x8x64xf32>
    %27 = arith.mulf %23, %26 : vector<2x8x64xf32>
    %28 = arith.addf %22, %27 : vector<2x8x64xf32>
    %29 = vector.extract_strided_slice %9 {offsets = [0, 3, 0], sizes = [2, 8, 64], strides = [1, 1, 1]} : vector<2x11x64xf32> to vector<2x8x64xf32>
    %c3 = arith.constant 3 : index
    %c0_10 = arith.constant 0 : index
    %30 = vector.load %arg3[%c3, %c0_10] : memref<4x64xf32, #tpu.memory_space<vmem>>, vector<1x64xf32>
    %31 = vector.shape_cast %30 : vector<1x64xf32> to vector<1x1x64xf32>
    %32 = vector.broadcast %31 : vector<1x1x64xf32> to vector<2x8x64xf32>
    %33 = arith.mulf %29, %32 : vector<2x8x64xf32>
    %34 = arith.addf %28, %33 : vector<2x8x64xf32>
    %c0_11 = arith.constant 0 : index
    %c0_12 = arith.constant 0 : index
    %35 = vector.load %arg4[%c0_11, %c0_12] : memref<1x64xf32, #tpu.memory_space<vmem>>, vector<1x64xf32>
    %36 = vector.shape_cast %35 : vector<1x64xf32> to vector<1x1x64xf32>
    %37 = vector.broadcast %36 : vector<1x1x64xf32> to vector<2x8x64xf32>
    %38 = arith.addf %34, %37 : vector<2x8x64xf32>
    %cst_13 = arith.constant 5.000000e-01 : f32
    %39 = vector.broadcast %cst_13 : f32 to vector<2x8x64xf32>
    %40 = arith.mulf %39, %38 : vector<2x8x64xf32>
    %41 = math.tanh %40 : vector<2x8x64xf32>
    %cst_14 = arith.constant 1.000000e+00 : f32
    %42 = vector.broadcast %cst_14 : f32 to vector<2x8x64xf32>
    %43 = arith.addf %41, %42 : vector<2x8x64xf32>
    %cst_15 = arith.constant 5.000000e-01 : f32
    %44 = vector.broadcast %cst_15 : f32 to vector<2x8x64xf32>
    %45 = arith.mulf %44, %43 : vector<2x8x64xf32>
    %46 = arith.mulf %38, %45 : vector<2x8x64xf32>
    %47 = vector.shape_cast %46 : vector<2x8x64xf32> to vector<16x64xf32>
    %48 = arith.truncf %47 : vector<16x64xf32> to vector<16x64xbf16>
    %c0_16 = arith.constant 0 : index
    %c0_17 = arith.constant 0 : index
    %49 = vector.load %arg5[%c0_16, %c0_17] : memref<64x34xbf16, #tpu.memory_space<vmem>>, vector<64x34xbf16>
    %cst_18 = arith.constant dense<0.000000e+00> : vector<16x34xf32>
    %50 = tpu.matmul %48, %49, %cst_18 {dimension_numbers = #tpu.dot_dimension_numbers<[1], [0], [0], [1], [0, 0, 1, 1], [], []>} : vector<16x64xbf16>, vector<64x34xbf16>, vector<16x34xf32> -> vector<16x34xf32>
    %51 = vector.extract_strided_slice %50 {offsets = [0, 0], sizes = [16, 2], strides = [1, 1]} : vector<16x34xf32> to vector<16x2xf32>
    %52 = vector.extract_strided_slice %50 {offsets = [0, 2], sizes = [16, 16], strides = [1, 1]} : vector<16x34xf32> to vector<16x16xf32>
    %53 = vector.extract_strided_slice %50 {offsets = [0, 18], sizes = [16, 16], strides = [1, 1]} : vector<16x34xf32> to vector<16x16xf32>
    %54 = arith.truncf %51 : vector<16x2xf32> to vector<16x2xbf16>
    %c0_19 = arith.constant 0 : index
    %c0_20 = arith.constant 0 : index
    %55 = vector.load %arg6[%c0_19, %c0_20] : memref<2x64xbf16, #tpu.memory_space<vmem>>, vector<2x64xbf16>
    %cst_21 = arith.constant dense<0.000000e+00> : vector<16x64xf32>
    %56 = tpu.matmul %54, %55, %cst_21 {dimension_numbers = #tpu.dot_dimension_numbers<[1], [0], [0], [1], [0, 0, 1, 1], [], []>} : vector<16x2xbf16>, vector<2x64xbf16>, vector<16x64xf32> -> vector<16x64xf32>
    %c0_22 = arith.constant 0 : index
    %c0_23 = arith.constant 0 : index
    %57 = vector.load %arg7[%c0_22, %c0_23] : memref<1x64xf32, #tpu.memory_space<vmem>>, vector<1x64xf32>
    %58 = vector.broadcast %57 : vector<1x64xf32> to vector<16x64xf32>
    %59 = arith.addf %56, %58 : vector<16x64xf32>
    %cst_24 = arith.constant 0.000000e+00 : f32
    %60 = vector.broadcast %cst_24 : f32 to vector<16x64xf32>
    %61 = arith.maximumf %59, %60 : vector<16x64xf32>
    %62 = math.absf %59 : vector<16x64xf32>
    %cst_25 = arith.constant 0.000000e+00 : f32
    %63 = vector.broadcast %cst_25 : f32 to vector<16x64xf32>
    %64 = arith.subf %63, %62 : vector<16x64xf32>
    %65 = math.exp %64 : vector<16x64xf32>
    %cst_26 = arith.constant 1.000000e+00 : f32
    %66 = vector.broadcast %cst_26 : f32 to vector<16x64xf32>
    %67 = arith.addf %66, %65 : vector<16x64xf32>
    %68 = math.log %67 : vector<16x64xf32>
    %69 = arith.addf %61, %68 : vector<16x64xf32>
    %70 = arith.mulf %69, %47 : vector<16x64xf32>
    %71 = vector.shape_cast %69 : vector<16x64xf32> to vector<2x8x64xf32>
    %72 = vector.shape_cast %70 : vector<16x64xf32> to vector<2x8x64xf32>
    %73 = vector.shape_cast %52 : vector<16x16xf32> to vector<2x8x16xf32>
    %74 = tpu.transpose %73, [0, 2, 1] : vector<2x8x16xf32> -> vector<2x16x8xf32>
    %75 = vector.shape_cast %53 : vector<16x16xf32> to vector<2x8x16xf32>
    %76 = tpu.transpose %75, [0, 2, 1] : vector<2x8x16xf32> -> vector<2x16x8xf32>
    %c0_27 = arith.constant 0 : index
    %c0_28 = arith.constant 0 : index
    %77 = vector.load %arg8[%c0_27, %c0_28] : memref<16x64xf32, #tpu.memory_space<vmem>>, vector<16x64xf32>
    %78 = vector.shape_cast %71 : vector<2x8x64xf32> to vector<2x8x1x64xf32>
    %79 = vector.shape_cast %77 : vector<16x64xf32> to vector<1x1x16x64xf32>
    %80 = vector.broadcast %78 : vector<2x8x1x64xf32> to vector<2x8x16x64xf32>
    %81 = vector.broadcast %79 : vector<1x1x16x64xf32> to vector<2x8x16x64xf32>
    %82 = arith.mulf %80, %81 : vector<2x8x16x64xf32>
    %83 = math.exp %82 : vector<2x8x16x64xf32>
    %cst_29 = arith.constant 0.000000e+00 : f32
    %84 = vector.broadcast %cst_29 : f32 to vector<2x16x64xf32>
    %85 = vector.extract_strided_slice %74 {offsets = [0, 0, 0], sizes = [2, 16, 1], strides = [1, 1, 1]} : vector<2x16x8xf32> to vector<2x16x1xf32>
    %86 = vector.extract_strided_slice %72 {offsets = [0, 0, 0], sizes = [2, 1, 64], strides = [1, 1, 1]} : vector<2x8x64xf32> to vector<2x1x64xf32>
    %87 = vector.broadcast %85 : vector<2x16x1xf32> to vector<2x16x64xf32>
    %88 = vector.broadcast %86 : vector<2x1x64xf32> to vector<2x16x64xf32>
    %89 = arith.mulf %87, %88 : vector<2x16x64xf32>
    %90 = vector.extract_strided_slice %83 {offsets = [0, 0, 0, 0], sizes = [2, 1, 16, 64], strides = [1, 1, 1, 1]} : vector<2x8x16x64xf32> to vector<2x1x16x64xf32>
    %91 = vector.shape_cast %90 : vector<2x1x16x64xf32> to vector<2x16x64xf32>
    %92 = arith.mulf %91, %84 : vector<2x16x64xf32>
    %93 = arith.addf %92, %89 : vector<2x16x64xf32>
    %94 = vector.extract_strided_slice %76 {offsets = [0, 0, 0], sizes = [2, 16, 1], strides = [1, 1, 1]} : vector<2x16x8xf32> to vector<2x16x1xf32>
    %95 = vector.broadcast %94 : vector<2x16x1xf32> to vector<2x16x64xf32>
    %96 = arith.mulf %95, %93 : vector<2x16x64xf32>
    %cst_30 = arith.constant dense<0.000000e+00> : vector<2x64xf32>
    %97 = vector.multi_reduction <add>, %96, %cst_30 [1] : vector<2x16x64xf32> to vector<2x64xf32>
    %98 = vector.shape_cast %97 : vector<2x64xf32> to vector<2x1x64xf32>
    %99 = vector.extract_strided_slice %74 {offsets = [0, 0, 1], sizes = [2, 16, 1], strides = [1, 1, 1]} : vector<2x16x8xf32> to vector<2x16x1xf32>
    %100 = vector.extract_strided_slice %72 {offsets = [0, 1, 0], sizes = [2, 1, 64], strides = [1, 1, 1]} : vector<2x8x64xf32> to vector<2x1x64xf32>
    %101 = vector.broadcast %99 : vector<2x16x1xf32> to vector<2x16x64xf32>
    %102 = vector.broadcast %100 : vector<2x1x64xf32> to vector<2x16x64xf32>
    %103 = arith.mulf %101, %102 : vector<2x16x64xf32>
    %104 = vector.extract_strided_slice %83 {offsets = [0, 1, 0, 0], sizes = [2, 1, 16, 64], strides = [1, 1, 1, 1]} : vector<2x8x16x64xf32> to vector<2x1x16x64xf32>
    %105 = vector.shape_cast %104 : vector<2x1x16x64xf32> to vector<2x16x64xf32>
    %106 = arith.mulf %105, %93 : vector<2x16x64xf32>
    %107 = arith.addf %106, %103 : vector<2x16x64xf32>
    %108 = vector.extract_strided_slice %76 {offsets = [0, 0, 1], sizes = [2, 16, 1], strides = [1, 1, 1]} : vector<2x16x8xf32> to vector<2x16x1xf32>
    %109 = vector.broadcast %108 : vector<2x16x1xf32> to vector<2x16x64xf32>
    %110 = arith.mulf %109, %107 : vector<2x16x64xf32>
    %cst_31 = arith.constant dense<0.000000e+00> : vector<2x64xf32>
    %111 = vector.multi_reduction <add>, %110, %cst_31 [1] : vector<2x16x64xf32> to vector<2x64xf32>
    %112 = vector.shape_cast %111 : vector<2x64xf32> to vector<2x1x64xf32>
    %113 = vector.extract_strided_slice %74 {offsets = [0, 0, 2], sizes = [2, 16, 1], strides = [1, 1, 1]} : vector<2x16x8xf32> to vector<2x16x1xf32>
    %114 = vector.extract_strided_slice %72 {offsets = [0, 2, 0], sizes = [2, 1, 64], strides = [1, 1, 1]} : vector<2x8x64xf32> to vector<2x1x64xf32>
    %115 = vector.broadcast %113 : vector<2x16x1xf32> to vector<2x16x64xf32>
    %116 = vector.broadcast %114 : vector<2x1x64xf32> to vector<2x16x64xf32>
    %117 = arith.mulf %115, %116 : vector<2x16x64xf32>
    %118 = vector.extract_strided_slice %83 {offsets = [0, 2, 0, 0], sizes = [2, 1, 16, 64], strides = [1, 1, 1, 1]} : vector<2x8x16x64xf32> to vector<2x1x16x64xf32>
    %119 = vector.shape_cast %118 : vector<2x1x16x64xf32> to vector<2x16x64xf32>
    %120 = arith.mulf %119, %107 : vector<2x16x64xf32>
    %121 = arith.addf %120, %117 : vector<2x16x64xf32>
    %122 = vector.extract_strided_slice %76 {offsets = [0, 0, 2], sizes = [2, 16, 1], strides = [1, 1, 1]} : vector<2x16x8xf32> to vector<2x16x1xf32>
    %123 = vector.broadcast %122 : vector<2x16x1xf32> to vector<2x16x64xf32>
    %124 = arith.mulf %123, %121 : vector<2x16x64xf32>
    %cst_32 = arith.constant dense<0.000000e+00> : vector<2x64xf32>
    %125 = vector.multi_reduction <add>, %124, %cst_32 [1] : vector<2x16x64xf32> to vector<2x64xf32>
    %126 = vector.shape_cast %125 : vector<2x64xf32> to vector<2x1x64xf32>
    %127 = vector.extract_strided_slice %74 {offsets = [0, 0, 3], sizes = [2, 16, 1], strides = [1, 1, 1]} : vector<2x16x8xf32> to vector<2x16x1xf32>
    %128 = vector.extract_strided_slice %72 {offsets = [0, 3, 0], sizes = [2, 1, 64], strides = [1, 1, 1]} : vector<2x8x64xf32> to vector<2x1x64xf32>
    %129 = vector.broadcast %127 : vector<2x16x1xf32> to vector<2x16x64xf32>
    %130 = vector.broadcast %128 : vector<2x1x64xf32> to vector<2x16x64xf32>
    %131 = arith.mulf %129, %130 : vector<2x16x64xf32>
    %132 = vector.extract_strided_slice %83 {offsets = [0, 3, 0, 0], sizes = [2, 1, 16, 64], strides = [1, 1, 1, 1]} : vector<2x8x16x64xf32> to vector<2x1x16x64xf32>
    %133 = vector.shape_cast %132 : vector<2x1x16x64xf32> to vector<2x16x64xf32>
    %134 = arith.mulf %133, %121 : vector<2x16x64xf32>
    %135 = arith.addf %134, %131 : vector<2x16x64xf32>
    %136 = vector.extract_strided_slice %76 {offsets = [0, 0, 3], sizes = [2, 16, 1], strides = [1, 1, 1]} : vector<2x16x8xf32> to vector<2x16x1xf32>
    %137 = vector.broadcast %136 : vector<2x16x1xf32> to vector<2x16x64xf32>
    %138 = arith.mulf %137, %135 : vector<2x16x64xf32>
    %cst_33 = arith.constant dense<0.000000e+00> : vector<2x64xf32>
    %139 = vector.multi_reduction <add>, %138, %cst_33 [1] : vector<2x16x64xf32> to vector<2x64xf32>
    %140 = vector.shape_cast %139 : vector<2x64xf32> to vector<2x1x64xf32>
    %141 = vector.extract_strided_slice %74 {offsets = [0, 0, 4], sizes = [2, 16, 1], strides = [1, 1, 1]} : vector<2x16x8xf32> to vector<2x16x1xf32>
    %142 = vector.extract_strided_slice %72 {offsets = [0, 4, 0], sizes = [2, 1, 64], strides = [1, 1, 1]} : vector<2x8x64xf32> to vector<2x1x64xf32>
    %143 = vector.broadcast %141 : vector<2x16x1xf32> to vector<2x16x64xf32>
    %144 = vector.broadcast %142 : vector<2x1x64xf32> to vector<2x16x64xf32>
    %145 = arith.mulf %143, %144 : vector<2x16x64xf32>
    %146 = vector.extract_strided_slice %83 {offsets = [0, 4, 0, 0], sizes = [2, 1, 16, 64], strides = [1, 1, 1, 1]} : vector<2x8x16x64xf32> to vector<2x1x16x64xf32>
    %147 = vector.shape_cast %146 : vector<2x1x16x64xf32> to vector<2x16x64xf32>
    %148 = arith.mulf %147, %135 : vector<2x16x64xf32>
    %149 = arith.addf %148, %145 : vector<2x16x64xf32>
    %150 = vector.extract_strided_slice %76 {offsets = [0, 0, 4], sizes = [2, 16, 1], strides = [1, 1, 1]} : vector<2x16x8xf32> to vector<2x16x1xf32>
    %151 = vector.broadcast %150 : vector<2x16x1xf32> to vector<2x16x64xf32>
    %152 = arith.mulf %151, %149 : vector<2x16x64xf32>
    %cst_34 = arith.constant dense<0.000000e+00> : vector<2x64xf32>
    %153 = vector.multi_reduction <add>, %152, %cst_34 [1] : vector<2x16x64xf32> to vector<2x64xf32>
    %154 = vector.shape_cast %153 : vector<2x64xf32> to vector<2x1x64xf32>
    %155 = vector.extract_strided_slice %74 {offsets = [0, 0, 5], sizes = [2, 16, 1], strides = [1, 1, 1]} : vector<2x16x8xf32> to vector<2x16x1xf32>
    %156 = vector.extract_strided_slice %72 {offsets = [0, 5, 0], sizes = [2, 1, 64], strides = [1, 1, 1]} : vector<2x8x64xf32> to vector<2x1x64xf32>
    %157 = vector.broadcast %155 : vector<2x16x1xf32> to vector<2x16x64xf32>
    %158 = vector.broadcast %156 : vector<2x1x64xf32> to vector<2x16x64xf32>
    %159 = arith.mulf %157, %158 : vector<2x16x64xf32>
    %160 = vector.extract_strided_slice %83 {offsets = [0, 5, 0, 0], sizes = [2, 1, 16, 64], strides = [1, 1, 1, 1]} : vector<2x8x16x64xf32> to vector<2x1x16x64xf32>
    %161 = vector.shape_cast %160 : vector<2x1x16x64xf32> to vector<2x16x64xf32>
    %162 = arith.mulf %161, %149 : vector<2x16x64xf32>
    %163 = arith.addf %162, %159 : vector<2x16x64xf32>
    %164 = vector.extract_strided_slice %76 {offsets = [0, 0, 5], sizes = [2, 16, 1], strides = [1, 1, 1]} : vector<2x16x8xf32> to vector<2x16x1xf32>
    %165 = vector.broadcast %164 : vector<2x16x1xf32> to vector<2x16x64xf32>
    %166 = arith.mulf %165, %163 : vector<2x16x64xf32>
    %cst_35 = arith.constant dense<0.000000e+00> : vector<2x64xf32>
    %167 = vector.multi_reduction <add>, %166, %cst_35 [1] : vector<2x16x64xf32> to vector<2x64xf32>
    %168 = vector.shape_cast %167 : vector<2x64xf32> to vector<2x1x64xf32>
    %169 = vector.extract_strided_slice %74 {offsets = [0, 0, 6], sizes = [2, 16, 1], strides = [1, 1, 1]} : vector<2x16x8xf32> to vector<2x16x1xf32>
    %170 = vector.extract_strided_slice %72 {offsets = [0, 6, 0], sizes = [2, 1, 64], strides = [1, 1, 1]} : vector<2x8x64xf32> to vector<2x1x64xf32>
    %171 = vector.broadcast %169 : vector<2x16x1xf32> to vector<2x16x64xf32>
    %172 = vector.broadcast %170 : vector<2x1x64xf32> to vector<2x16x64xf32>
    %173 = arith.mulf %171, %172 : vector<2x16x64xf32>
    %174 = vector.extract_strided_slice %83 {offsets = [0, 6, 0, 0], sizes = [2, 1, 16, 64], strides = [1, 1, 1, 1]} : vector<2x8x16x64xf32> to vector<2x1x16x64xf32>
    %175 = vector.shape_cast %174 : vector<2x1x16x64xf32> to vector<2x16x64xf32>
    %176 = arith.mulf %175, %163 : vector<2x16x64xf32>
    %177 = arith.addf %176, %173 : vector<2x16x64xf32>
    %178 = vector.extract_strided_slice %76 {offsets = [0, 0, 6], sizes = [2, 16, 1], strides = [1, 1, 1]} : vector<2x16x8xf32> to vector<2x16x1xf32>
    %179 = vector.broadcast %178 : vector<2x16x1xf32> to vector<2x16x64xf32>
    %180 = arith.mulf %179, %177 : vector<2x16x64xf32>
    %cst_36 = arith.constant dense<0.000000e+00> : vector<2x64xf32>
    %181 = vector.multi_reduction <add>, %180, %cst_36 [1] : vector<2x16x64xf32> to vector<2x64xf32>
    %182 = vector.shape_cast %181 : vector<2x64xf32> to vector<2x1x64xf32>
    %183 = vector.extract_strided_slice %74 {offsets = [0, 0, 7], sizes = [2, 16, 1], strides = [1, 1, 1]} : vector<2x16x8xf32> to vector<2x16x1xf32>
    %184 = vector.extract_strided_slice %72 {offsets = [0, 7, 0], sizes = [2, 1, 64], strides = [1, 1, 1]} : vector<2x8x64xf32> to vector<2x1x64xf32>
    %185 = vector.broadcast %183 : vector<2x16x1xf32> to vector<2x16x64xf32>
    %186 = vector.broadcast %184 : vector<2x1x64xf32> to vector<2x16x64xf32>
    %187 = arith.mulf %185, %186 : vector<2x16x64xf32>
    %188 = vector.extract_strided_slice %83 {offsets = [0, 7, 0, 0], sizes = [2, 1, 16, 64], strides = [1, 1, 1, 1]} : vector<2x8x16x64xf32> to vector<2x1x16x64xf32>
    %189 = vector.shape_cast %188 : vector<2x1x16x64xf32> to vector<2x16x64xf32>
    %190 = arith.mulf %189, %177 : vector<2x16x64xf32>
    %191 = arith.addf %190, %187 : vector<2x16x64xf32>
    %192 = vector.extract_strided_slice %76 {offsets = [0, 0, 7], sizes = [2, 16, 1], strides = [1, 1, 1]} : vector<2x16x8xf32> to vector<2x16x1xf32>
    %193 = vector.broadcast %192 : vector<2x16x1xf32> to vector<2x16x64xf32>
    %194 = arith.mulf %193, %191 : vector<2x16x64xf32>
    %cst_37 = arith.constant dense<0.000000e+00> : vector<2x64xf32>
    %195 = vector.multi_reduction <add>, %194, %cst_37 [1] : vector<2x16x64xf32> to vector<2x64xf32>
    %196 = vector.shape_cast %195 : vector<2x64xf32> to vector<2x1x64xf32>
    %197 = tpu.concatenate %98, %112, %126, %140, %154, %168, %182, %196 in 1 : vector<2x1x64xf32>, vector<2x1x64xf32>, vector<2x1x64xf32>, vector<2x1x64xf32>, vector<2x1x64xf32>, vector<2x1x64xf32>, vector<2x1x64xf32>, vector<2x1x64xf32> -> vector<2x8x64xf32>
    %198 = vector.shape_cast %197 : vector<2x8x64xf32> to vector<16x64xf32>
    %c0_38 = arith.constant 0 : index
    %c0_39 = arith.constant 0 : index
    %199 = vector.load %arg9[%c0_38, %c0_39] : memref<1x64xf32, #tpu.memory_space<vmem>>, vector<1x64xf32>
    %200 = vector.broadcast %199 : vector<1x64xf32> to vector<16x64xf32>
    %201 = arith.mulf %47, %200 : vector<16x64xf32>
    %202 = arith.addf %198, %201 : vector<16x64xf32>
    %cst_40 = arith.constant 5.000000e-01 : f32
    %203 = vector.broadcast %cst_40 : f32 to vector<16x64xf32>
    %204 = arith.mulf %203, %6 : vector<16x64xf32>
    %205 = math.tanh %204 : vector<16x64xf32>
    %cst_41 = arith.constant 1.000000e+00 : f32
    %206 = vector.broadcast %cst_41 : f32 to vector<16x64xf32>
    %207 = arith.addf %205, %206 : vector<16x64xf32>
    %cst_42 = arith.constant 5.000000e-01 : f32
    %208 = vector.broadcast %cst_42 : f32 to vector<16x64xf32>
    %209 = arith.mulf %208, %207 : vector<16x64xf32>
    %210 = arith.mulf %6, %209 : vector<16x64xf32>
    %211 = arith.mulf %202, %210 : vector<16x64xf32>
    %212 = arith.truncf %211 : vector<16x64xf32> to vector<16x64xbf16>
    %c0_43 = arith.constant 0 : index
    %c0_44 = arith.constant 0 : index
    %213 = vector.load %arg10[%c0_43, %c0_44] : memref<64x32xbf16, #tpu.memory_space<vmem>>, vector<64x32xbf16>
    %cst_45 = arith.constant dense<0.000000e+00> : vector<16x32xf32>
    %214 = tpu.matmul %212, %213, %cst_45 {dimension_numbers = #tpu.dot_dimension_numbers<[1], [0], [0], [1], [0, 0, 1, 1], [], []>} : vector<16x64xbf16>, vector<64x32xbf16>, vector<16x32xf32> -> vector<16x32xf32>
    %215 = vector.shape_cast %214 : vector<16x32xf32> to vector<2x8x32xf32>
    %c0_46 = arith.constant 0 : index
    %c0_47 = arith.constant 0 : index
    %c0_48 = arith.constant 0 : index
    %216 = vector.load %arg11[%c0_46, %c0_47, %c0_48] : memref<2x8x32xf32, #tpu.memory_space<vmem>>, vector<2x8x32xf32>
    tpu.vector_store %arg11[%c0_46, %c0_47, %c0_48], %215 {strides = array<i32>} : memref<2x8x32xf32, #tpu.memory_space<vmem>>, vector<2x8x32xf32>,
    return
  }
  func.func @transform_0(%arg0: i32) -> (i32, i32, i32) {
    %c0_i32 = arith.constant 0 : i32
    %c0_i32_0 = arith.constant 0 : i32
    %c0_i32_1 = arith.constant 0 : i32
    return %arg0, %c0_i32, %c0_i32_0 : i32, i32, i32
  }
  func.func @transform_1(%arg0: i32) -> (i32, i32) {
    %c0_i32 = arith.constant 0 : i32
    %c0_i32_0 = arith.constant 0 : i32
    %c0_i32_1 = arith.constant 0 : i32
    return %c0_i32, %c0_i32_0 : i32, i32
  }
  func.func @transform_2(%arg0: i32) -> (i32, i32) {
    %c0_i32 = arith.constant 0 : i32
    %c0_i32_0 = arith.constant 0 : i32
    %c0_i32_1 = arith.constant 0 : i32
    return %c0_i32, %c0_i32_0 : i32, i32
  }
  func.func @transform_3(%arg0: i32) -> (i32, i32) {
    %c0_i32 = arith.constant 0 : i32
    %c0_i32_0 = arith.constant 0 : i32
    %c0_i32_1 = arith.constant 0 : i32
    return %c0_i32, %c0_i32_0 : i32, i32
  }
  func.func @transform_4(%arg0: i32) -> (i32, i32) {
    %c0_i32 = arith.constant 0 : i32
    %c0_i32_0 = arith.constant 0 : i32
    %c0_i32_1 = arith.constant 0 : i32
    return %c0_i32, %c0_i32_0 : i32, i32
  }
  func.func @transform_5(%arg0: i32) -> (i32, i32) {
    %c0_i32 = arith.constant 0 : i32
    %c0_i32_0 = arith.constant 0 : i32
    %c0_i32_1 = arith.constant 0 : i32
    return %c0_i32, %c0_i32_0 : i32, i32
  }
  func.func @transform_6(%arg0: i32) -> (i32, i32) {
    %c0_i32 = arith.constant 0 : i32
    %c0_i32_0 = arith.constant 0 : i32
    %c0_i32_1 = arith.constant 0 : i32
    return %c0_i32, %c0_i32_0 : i32, i32
  }
  func.func @transform_7(%arg0: i32) -> (i32, i32) {
    %c0_i32 = arith.constant 0 : i32
    %c0_i32_0 = arith.constant 0 : i32
    %c0_i32_1 = arith.constant 0 : i32
    return %c0_i32, %c0_i32_0 : i32, i32
  }
  func.func @transform_8(%arg0: i32) -> (i32, i32) {
    %c0_i32 = arith.constant 0 : i32
    %c0_i32_0 = arith.constant 0 : i32
    %c0_i32_1 = arith.constant 0 : i32
    return %c0_i32, %c0_i32_0 : i32, i32
  }
  func.func @transform_9(%arg0: i32) -> (i32, i32) {
    %c0_i32 = arith.constant 0 : i32
    %c0_i32_0 = arith.constant 0 : i32
    %c0_i32_1 = arith.constant 0 : i32
    return %c0_i32, %c0_i32_0 : i32, i32
  }
  func.func @transform_10(%arg0: i32) -> (i32, i32, i32) {
    %c0_i32 = arith.constant 0 : i32
    %c0_i32_0 = arith.constant 0 : i32
    %c0_i32_1 = arith.constant 0 : i32
    return %arg0, %c0_i32, %c0_i32_0 : i32, i32, i32
  }
}

</mosaic_0001>

<llo_original>
// kernel: mamba_forward.1
$region0: #{mamba_forward.1}
  #allocation0 [shape = 'u32[]', space=smem, size = 0x4, offset = 0x4, fixed_abs, tag = 'smem constant byte address 0x4 - core index']
  #allocation1 [shape = 'u32[144,128]{1,0:T(1,128)}', space=vmem, size = 0x12000, scoped, tag = 'internal scratch']
  %s0 = inlined_call_operand.hbm [shape: f32[2,8,32], index: 0, kind: input, shape index: {}]
  %s1 = inlined_call_operand.hbm [shape: bf16[32,128], index: 1, kind: input, shape index: {}]
  %s2 = inlined_call_operand.hbm [shape: f32[4,64], index: 2, kind: input, shape index: {}]
  %s3 = inlined_call_operand.hbm [shape: f32[1,64], index: 3, kind: input, shape index: {}]
  %s4 = inlined_call_operand.hbm [shape: bf16[64,34], index: 4, kind: input, shape index: {}]
  %s5 = inlined_call_operand.hbm [shape: bf16[2,64], index: 5, kind: input, shape index: {}]
  %s6 = inlined_call_operand.hbm [shape: f32[1,64], index: 6, kind: input, shape index: {}]
  %s7 = inlined_call_operand.hbm [shape: f32[16,64], index: 7, kind: input, shape index: {}]
  %s8 = inlined_call_operand.hbm [shape: f32[1,64], index: 8, kind: input, shape index: {}]
  %s9 = inlined_call_operand.hbm [shape: bf16[64,32], index: 9, kind: input, shape index: {}]
  %s10 = inlined_call_operand.hbm [shape: f32[2,8,32], index: 10, kind: output, shape index: {}]
  %s11 = sld [smem:[#allocation0]]
  $region90: #{mamba_forward.1} parent=0
    _
  %s13 = ssub.s32 1, %s11
  %s14 = scalar_select 0, %s13, %s11
  $region1: #{mamba_forward.1} parent=0
    #allocation2 [shape = 'u8[8192]{0}', space=vmem, size = 0x2000, scoped, tag = 'input window, operand 0, single buffered']
    #allocation3 [shape = 's32[1]{0}', space=sflag, size = 0x4, scoped, tag = 'scoped memory for mamba_forward.1']
    #allocation4 [shape = 's32[1]{0}', space=sflag, size = 0x4, scoped, tag = 'scoped memory for mamba_forward.1']
    #allocation5 [shape = 'u8[8192]{0}', space=vmem, size = 0x2000, scoped, tag = 'input window, operand 1, single buffered']
    #allocation6 [shape = 's32[1]{0}', space=sflag, size = 0x4, scoped, tag = 'scoped memory for mamba_forward.1']
    #allocation7 [shape = 'u8[2048]{0}', space=vmem, size = 0x800, scoped, tag = 'input window, operand 2, single buffered']
    #allocation8 [shape = 'u8[512]{0}', space=vmem, size = 0x400, scoped, tag = 'input window, operand 3, single buffered']
    #allocation9 [shape = 's32[1]{0}', space=sflag, size = 0x4, scoped, tag = 'scoped memory for mamba_forward.1']
    #allocation10 [shape = 'u8[16384]{0}', space=vmem, size = 0x4000, scoped, tag = 'input window, operand 4, single buffered']
    #allocation11 [shape = 'u8[512]{0}', space=vmem, size = 0x400, scoped, tag = 'input window, operand 5, single buffered']
    #allocation12 [shape = 's32[1]{0}', space=sflag, size = 0x4, scoped, tag = 'scoped memory for mamba_forward.1']
    #allocation13 [shape = 'u8[512]{0}', space=vmem, size = 0x400, scoped, tag = 'input window, operand 6, single buffered']
    #allocation14 [shape = 'u8[8192]{0}', space=vmem, size = 0x2000, scoped, tag = 'input window, operand 7, single buffered']
    #allocation15 [shape = 's32[1]{0}', space=sflag, size = 0x4, scoped, tag = 'scoped memory for mamba_forward.1']
    #allocation16 [shape = 'u8[512]{0}', space=vmem, size = 0x400, scoped, tag = 'input window, operand 8, single buffered']
    #allocation17 [shape = 'u8[16384]{0}', space=vmem, size = 0x4000, scoped, tag = 'input window, operand 9, single buffered']
    #allocation18 [shape = 's32[1]{0}', space=sflag, size = 0x4, scoped, tag = 'scoped memory for mamba_forward.1']
    #allocation19 [shape = 'u8[8192]{0}', space=vmem, size = 0x2000, scoped, tag = 'output window, operand 0, single buffered']
    %15 = vsyncpa [#allocation3], 0
    %16 = vsyncpa [#allocation6], 0
    %17 = vsyncpa [#allocation9], 0
    %18 = vsyncpa [#allocation12], 0
    %19 = vsyncpa [#allocation15], 0
    %20 = vsyncpa [#allocation18], 0
    %21 = vsyncpa [#allocation4], 0
    // Predicated region
    $region2: #{mamba_forward.1} parent=1 // pred_check
      _
    $region3: #{mamba_forward.1} parent=1 // pred_check_branch
      %23 = sbr.rel (0) target = $region5
    $region4: #{mamba_forward.1} parent=1 // pred_region
      %s25 = ssub.s32 256, 256
      %26 = vsyncadd [#allocation3], %s25
      %s27 = sshll.u32 [#allocation2], 4
      %s28 = int_to_ptr.vmem [resolvable:$true] %s27
      %33 = dma.hbm_to_vmem [thread:$0]  %s0, 256, %s28, [#allocation3], 128, 128, 8
    $region5: #{mamba_forward.1} parent=1 // pred_fallthru
      _
    // Predicated region
    $region6: #{mamba_forward.1} parent=1 // pred_check
      _
    $region7: #{mamba_forward.1} parent=1 // pred_check_branch
      %35 = sbr.rel (0) target = $region9
    $region8: #{mamba_forward.1} parent=1 // pred_region
      %s37 = ssub.s32 256, 256
      %38 = vsyncadd [#allocation6], %s37
      %s39 = sshll.u32 [#allocation5], 4
      %s40 = int_to_ptr.vmem [resolvable:$true] %s39
      %45 = dma.hbm_to_vmem [thread:$0]  %s1, 256, %s40, [#allocation6], 64, 64, 4
    $region9: #{mamba_forward.1} parent=1 // pred_fallthru
      _
    // Predicated region
    $region10: #{mamba_forward.1} parent=1 // pred_check
      _
    $region11: #{mamba_forward.1} parent=1 // pred_check_branch
      %47 = sbr.rel (0) target = $region13
    $region12: #{mamba_forward.1} parent=1 // pred_region
      %s49 = ssub.s32 64, 64
      %50 = vsyncadd [#allocation6], %s49
      %s52 = sshll.u32 [#allocation7], 4
      %s53 = int_to_ptr.vmem [resolvable:$true] %s52
      %55 = dma.hbm_to_vmem [thread:$0]  %s2, 64, %s53, [#allocation6]
    $region13: #{mamba_forward.1} parent=1 // pred_fallthru
      _
    // Predicated region
    $region14: #{mamba_forward.1} parent=1 // pred_check
      _
    $region15: #{mamba_forward.1} parent=1 // pred_check_branch
      %57 = sbr.rel (0) target = $region17
    $region16: #{mamba_forward.1} parent=1 // pred_region
      %s59 = ssub.s32 16, 16
      %60 = vsyncadd [#allocation9], %s59
      %s62 = sshll.u32 [#allocation8], 4
      %s63 = int_to_ptr.vmem [resolvable:$true] %s62
      %65 = dma.hbm_to_vmem [thread:$0]  %s3, 16, %s63, [#allocation9]
    $region17: #{mamba_forward.1} parent=1 // pred_fallthru
      _
    // Predicated region
    $region18: #{mamba_forward.1} parent=1 // pred_check
      _
    $region19: #{mamba_forward.1} parent=1 // pred_check_branch
      %67 = sbr.rel (0) target = $region21
    $region20: #{mamba_forward.1} parent=1 // pred_region
      %s69 = ssub.s32 512, 512
      %70 = vsyncadd [#allocation9], %s69
      %s71 = sshll.u32 [#allocation10], 4
      %s72 = int_to_ptr.vmem [resolvable:$true] %s71
      %77 = dma.hbm_to_vmem [thread:$0]  %s4, 512, %s72, [#allocation9], 64, 64, 4
    $region21: #{mamba_forward.1} parent=1 // pred_fallthru
      _
    // Predicated region
    $region22: #{mamba_forward.1} parent=1 // pred_check
      _
    $region23: #{mamba_forward.1} parent=1 // pred_check_branch
      %79 = sbr.rel (0) target = $region25
    $region24: #{mamba_forward.1} parent=1 // pred_region
      %s81 = ssub.s32 16, 16
      %82 = vsyncadd [#allocation12], %s81
      %s84 = sshll.u32 [#allocation11], 4
      %s85 = int_to_ptr.vmem [resolvable:$true] %s84
      %87 = dma.hbm_to_vmem [thread:$0]  %s5, 16, %s85, [#allocation12]
    $region25: #{mamba_forward.1} parent=1 // pred_fallthru
      _
    // Predicated region
    $region26: #{mamba_forward.1} parent=1 // pred_check
      _
    $region27: #{mamba_forward.1} parent=1 // pred_check_branch
      %89 = sbr.rel (0) target = $region29
    $region28: #{mamba_forward.1} parent=1 // pred_region
      %s91 = ssub.s32 16, 16
      %92 = vsyncadd [#allocation12], %s91
      %s94 = sshll.u32 [#allocation13], 4
      %s95 = int_to_ptr.vmem [resolvable:$true] %s94
      %97 = dma.hbm_to_vmem [thread:$0]  %s6, 16, %s95, [#allocation12]
    $region29: #{mamba_forward.1} parent=1 // pred_fallthru
      _
    // Predicated region
    $region30: #{mamba_forward.1} parent=1 // pred_check
      _
    $region31: #{mamba_forward.1} parent=1 // pred_check_branch
      %99 = sbr.rel (0) target = $region33
    $region32: #{mamba_forward.1} parent=1 // pred_region
      %s101 = ssub.s32 256, 256
      %102 = vsyncadd [#allocation15], %s101
      %s103 = sshll.u32 [#allocation14], 4
      %s104 = int_to_ptr.vmem [resolvable:$true] %s103
      %109 = dma.hbm_to_vmem [thread:$0]  %s7, 256, %s104, [#allocation15], 128, 128, 8
    $region33: #{mamba_forward.1} parent=1 // pred_fallthru
      _
    // Predicated region
    $region34: #{mamba_forward.1} parent=1 // pred_check
      _
    $region35: #{mamba_forward.1} parent=1 // pred_check_branch
      %111 = sbr.rel (0) target = $region37
    $region36: #{mamba_forward.1} parent=1 // pred_region
      %s113 = ssub.s32 16, 16
      %114 = vsyncadd [#allocation15], %s113
      %s116 = sshll.u32 [#allocation16], 4
      %s117 = int_to_ptr.vmem [resolvable:$true] %s116
      %119 = dma.hbm_to_vmem [thread:$0]  %s8, 16, %s117, [#allocation15]
    $region37: #{mamba_forward.1} parent=1 // pred_fallthru
      _
    // Predicated region
    $region38: #{mamba_forward.1} parent=1 // pred_check
      _
    $region39: #{mamba_forward.1} parent=1 // pred_check_branch
      %121 = sbr.rel (0) target = $region41
    $region40: #{mamba_forward.1} parent=1 // pred_region
      %s123 = ssub.s32 512, 512
      %124 = vsyncadd [#allocation18], %s123
      %s125 = sshll.u32 [#allocation17], 4
      %s126 = int_to_ptr.vmem [resolvable:$true] %s125
      %131 = dma.hbm_to_vmem [thread:$0]  %s9, 512, %s126, [#allocation18], 64, 64, 4
    $region41: #{mamba_forward.1} parent=1 // pred_fallthru
      _
    // Predicated region
    $region42: #{mamba_forward.1} parent=1 // pred_check
      _
    $region43: #{mamba_forward.1} parent=1 // pred_check_branch
      %133 = sbr.rel (0) target = $region45
    $region44: #{mamba_forward.1} parent=1 // pred_region
      %134 = dma.done [#allocation3], 256
    $region45: #{mamba_forward.1} parent=1 // pred_fallthru
      _
    // Predicated region
    $region46: #{mamba_forward.1} parent=1 // pred_check
      _
    $region47: #{mamba_forward.1} parent=1 // pred_check_branch
      %136 = sbr.rel (0) target = $region49
    $region48: #{mamba_forward.1} parent=1 // pred_region
      %137 = dma.done [#allocation6], 256
    $region49: #{mamba_forward.1} parent=1 // pred_fallthru
      _
    // Predicated region
    $region50: #{mamba_forward.1} parent=1 // pred_check
      _
    $region51: #{mamba_forward.1} parent=1 // pred_check_branch
      %139 = sbr.rel (0) target = $region53
    $region52: #{mamba_forward.1} parent=1 // pred_region
      %140 = dma.done [#allocation6], 64
    $region53: #{mamba_forward.1} parent=1 // pred_fallthru
      _
    // Predicated region
    $region54: #{mamba_forward.1} parent=1 // pred_check
      _
    $region55: #{mamba_forward.1} parent=1 // pred_check_branch
      %142 = sbr.rel (0) target = $region57
    $region56: #{mamba_forward.1} parent=1 // pred_region
      %143 = dma.done [#allocation9], 16
    $region57: #{mamba_forward.1} parent=1 // pred_fallthru
      _
    // Predicated region
    $region58: #{mamba_forward.1} parent=1 // pred_check
      _
    $region59: #{mamba_forward.1} parent=1 // pred_check_branch
      %145 = sbr.rel (0) target = $region61
    $region60: #{mamba_forward.1} parent=1 // pred_region
      %146 = dma.done [#allocation9], 512
    $region61: #{mamba_forward.1} parent=1 // pred_fallthru
      _
    // Predicated region
    $region62: #{mamba_forward.1} parent=1 // pred_check
      _
    $region63: #{mamba_forward.1} parent=1 // pred_check_branch
      %148 = sbr.rel (0) target = $region65
    $region64: #{mamba_forward.1} parent=1 // pred_region
      %149 = dma.done [#allocation12], 16
    $region65: #{mamba_forward.1} parent=1 // pred_fallthru
      _
    // Predicated region
    $region66: #{mamba_forward.1} parent=1 // pred_check
      _
    $region67: #{mamba_forward.1} parent=1 // pred_check_branch
      %151 = sbr.rel (0) target = $region69
    $region68: #{mamba_forward.1} parent=1 // pred_region
      %152 = dma.done [#allocation12], 16
    $region69: #{mamba_forward.1} parent=1 // pred_fallthru
      _
    // Predicated region
    $region70: #{mamba_forward.1} parent=1 // pred_check
      _
    $region71: #{mamba_forward.1} parent=1 // pred_check_branch
      %154 = sbr.rel (0) target = $region73
    $region72: #{mamba_forward.1} parent=1 // pred_region
      %155 = dma.done [#allocation15], 256
    $region73: #{mamba_forward.1} parent=1 // pred_fallthru
      _
    // Predicated region
    $region74: #{mamba_forward.1} parent=1 // pred_check
      _
    $region75: #{mamba_forward.1} parent=1 // pred_check_branch
      %157 = sbr.rel (0) target = $region77
    $region76: #{mamba_forward.1} parent=1 // pred_region
      %158 = dma.done [#allocation15], 16
    $region77: #{mamba_forward.1} parent=1 // pred_fallthru
      _
    // Predicated region
    $region78: #{mamba_forward.1} parent=1 // pred_check
      _
    $region79: #{mamba_forward.1} parent=1 // pred_check_branch
      %160 = sbr.rel (0) target = $region81
    $region80: #{mamba_forward.1} parent=1 // pred_region
      %161 = dma.done [#allocation18], 512
    $region81: #{mamba_forward.1} parent=1 // pred_fallthru
      _
    %v163 = vld [vmem:[#allocation2] sm:$0xff]
    %v164 = vld [vmem:[#allocation2 + $0x8] sm:$0xff]
    %v165 = vpack.c.bf16 %v164, %v163
    %v166 = vld [vmem:[#allocation5] sm:$0xf]
    %v167 = vld [vmem:[#allocation5 + $0x4] sm:$0xf]
    %v168 = vld [vmem:[#allocation5 + $0x8] sm:$0xf]
    %v169 = vld [vmem:[#allocation5 + $0xc] sm:$0xf]
    %v174 = vunpack.c.l.b16 %v166
    %v175 = vunpack.c.l.b16 %v167
    %v176 = vunpack.c.l.b16 %v168
    %v177 = vunpack.c.l.b16 %v169
    %v178 = vpack.c.b16 %v175, %v174
    %v179 = vpack.c.b16 %v177, %v176
    %vm182 = vcmask 261120
    %v184 = vsel %vm182, %v165, 0
    %186 = vmatprep.subr.bf16.mxu0 0
    %187 = vmatpush1.bf16.msra.mxu0 %v178
    %188 = vmatprep.subr.bf16.mxu0 0
    %189 = vmatpush1.bf16.msra.mxu0 %v179
    %190 = vmatprep.subr.bf16.mxu0 0
    %191 = vmatpush1.bf16.msra.mxu0 0
    %192 = vmatprep.subr.bf16.mxu0 0
    %193 = vmatpush1.bf16.msra.mxu0 0
    %194 = vmatprep.subr.bf16.mxu0 0
    %195 = vmatpush1.bf16.msra.mxu0 0
    %196 = vmatprep.subr.bf16.mxu0 0
    %197 = vmatpush1.bf16.msra.mxu0 0
    %198 = vmatprep.subr.bf16.mxu0 0
    %199 = vmatpush1.bf16.msra.mxu0 0
    %200 = vmatprep.subr.bf16.mxu0 0
    %201 = vmatpush1.bf16.msra.mxu0 0
    %202 = vmatprep.subr.bf16.mxu0 0
    %203 = vmatpush1.bf16.msra.mxu0 0
    %204 = vmatprep.subr.bf16.mxu0 0
    %205 = vmatpush1.bf16.msra.mxu0 0
    %206 = vmatprep.subr.bf16.mxu0 0
    %207 = vmatpush1.bf16.msra.mxu0 0
    %208 = vmatprep.subr.bf16.mxu0 0
    %209 = vmatpush1.bf16.msra.mxu0 0
    %210 = vmatprep.subr.bf16.mxu0 0
    %211 = vmatpush1.bf16.msra.mxu0 0
    %212 = vmatprep.subr.bf16.mxu0 0
    %213 = vmatpush1.bf16.msra.mxu0 0
    %214 = vmatprep.subr.bf16.mxu0 0
    %215 = vmatpush1.bf16.msra.mxu0 0
    %216 = vmatprep.subr.bf16.mxu0 0
    %217 = vmatpush1.bf16.msra.mxu0 0
    %218 = vmatprep.mubr.bf16.mxu0 0
    %219 = vmatmul.mubr.bf16.gmra.mrb[0].mxu0 %v184
    %v220 = vpop.f32.mrb[0].mxu0
    %v221 = vadd.f32 0.0, %v220
    %v222 = vpop.f32.mrb[0].mxu0
    %v223 = vpop.f32.mrb[0].mxu0
    %v224 = vadd.f32 0.0, %v223
    %v225 = vpop.f32.mrb[0].mxu0
    %226 = vdwg.mxu0
    %v229 = vrot.slane %v221, 5
    %v230 = vrot.slane %v224, 5
    %vm233 = vcmask 1042432
    %v234 = vsel %vm233, 0.0, %v229
    %v235 = vsel %vm233, 0.0, %v230
    %v236 = vld [vmem:[#allocation7] sm:$0x1]
    %v237 = vlaneseq
    %v238 = vshrl.u32 %v237, 7
    %v239 = vsub.s32 0, %v238
    %v240 = vrot.slane %v236, %v239
    %v241 = vmul.f32 %v234, %v240
    %v242 = vmul.f32 %v235, %v240
    %v243 = vadd.f32 %v241, 0.0
    %v244 = vadd.f32 %v242, 0.0
    %v245 = vld [vmem:[#allocation7 + $0x1] sm:$0x1]
    %v246 = vlaneseq
    %v247 = vshrl.u32 %v246, 7
    %v248 = vsub.s32 0, %v247
    %v249 = vrot.slane %v245, %v248
    %v250 = vmul.f32 %v234, %v249
    %v251 = vmul.f32 %v229, %v249
    %v252 = vmul.f32 %v235, %v249
    %v253 = vmul.f32 %v230, %v249
    %vm258 = vcmask 1046528
    %v259 = vrot.slane %v250, 1
    %v260 = vrot.slane %v251, 1
    %v261 = vsel %vm258, %v259, %v260
    %v262 = vrot.slane %v252, 1
    %v263 = vrot.slane %v253, 1
    %v264 = vsel %vm258, %v262, %v263
    %v267 = vadd.f32 %v243, %v261
    %v268 = vadd.f32 %v244, %v264
    %v269 = vld [vmem:[#allocation7 + $0x2] sm:$0x1]
    %v270 = vlaneseq
    %v271 = vshrl.u32 %v270, 7
    %v272 = vsub.s32 0, %v271
    %v273 = vrot.slane %v269, %v272
    %v274 = vmul.f32 %v234, %v273
    %v275 = vmul.f32 %v229, %v273
    %v276 = vmul.f32 %v235, %v273
    %v277 = vmul.f32 %v230, %v273
    %vm282 = vcmask 1045504
    %v283 = vrot.slane %v274, 2
    %v284 = vrot.slane %v275, 2
    %v285 = vsel %vm282, %v283, %v284
    %v286 = vrot.slane %v276, 2
    %v287 = vrot.slane %v277, 2
    %v288 = vsel %vm282, %v286, %v287
    %v291 = vadd.f32 %v267, %v285
    %v292 = vadd.f32 %v268, %v288
    %v293 = vld [vmem:[#allocation7 + $0x3] sm:$0x1]
    %v294 = vlaneseq
    %v295 = vshrl.u32 %v294, 7
    %v296 = vsub.s32 0, %v295
    %v297 = vrot.slane %v293, %v296
    %v298 = vmul.f32 %v234, %v297
    %v299 = vmul.f32 %v229, %v297
    %v300 = vmul.f32 %v235, %v297
    %v301 = vmul.f32 %v230, %v297
    %vm306 = vcmask 1044480
    %v307 = vrot.slane %v298, 3
    %v308 = vrot.slane %v299, 3
    %v309 = vsel %vm306, %v307, %v308
    %v310 = vrot.slane %v300, 3
    %v311 = vrot.slane %v301, 3
    %v312 = vsel %vm306, %v310, %v311
    %v315 = vadd.f32 %v291, %v309
    %v316 = vadd.f32 %v292, %v312
    %v317 = vld [vmem:[#allocation8] sm:$0x1]
    %v319 = vlaneseq
    %v320 = vshrl.u32 %v319, 7
    %v321 = vsub.s32 0, %v320
    %v322 = vrot.slane %v317, %v321
    %v324 = vadd.f32 %v315, %v322
    %v325 = vadd.f32 %v316, %v322
    %v326 = vmul.f32 %v324, 0.5
    %v327 = vmul.f32 %v325, 0.5
    %v328 = vtanh.pop %v326
    %v329 = vtanh.pop %v327
    %v330 = vadd.f32 %v328, 1.0
    %v331 = vadd.f32 %v329, 1.0
    %v332 = vmul.f32 %v330, 0.5
    %v333 = vmul.f32 %v331, 0.5
    %v334 = vmul.f32 %v324, %v332
    %v335 = vmul.f32 %v325, %v333
    %v336 = vpack.c.bf16 %v335, %v334
    %v337 = vld [vmem:[#allocation10] sm:$0xf]
    %v338 = vld [vmem:[#allocation10 + $0x4] sm:$0xf]
    %v339 = vld [vmem:[#allocation10 + $0x8] sm:$0xf]
    %v340 = vld [vmem:[#allocation10 + $0xc] sm:$0xf]
    %v341 = vld [vmem:[#allocation10 + $0x10] sm:$0xf]
    %v342 = vld [vmem:[#allocation10 + $0x14] sm:$0xf]
    %v343 = vld [vmem:[#allocation10 + $0x18] sm:$0xf]
    %v344 = vld [vmem:[#allocation10 + $0x1c] sm:$0xf]
    %v353 = vunpack.c.l.b16 %v337
    %v354 = vunpack.c.l.b16 %v338
    %v355 = vunpack.c.l.b16 %v339
    %v356 = vunpack.c.l.b16 %v340
    %v357 = vunpack.c.l.b16 %v341
    %v358 = vunpack.c.l.b16 %v342
    %v359 = vunpack.c.l.b16 %v343
    %v360 = vunpack.c.l.b16 %v344
    %v361 = vpack.c.b16 %v354, %v353
    %v362 = vpack.c.b16 %v356, %v355
    %v363 = vpack.c.b16 %v358, %v357
    %v364 = vpack.c.b16 %v360, %v359
    %vm369 = vcmask 523264
    %v371 = vsel %vm369, %v336, 0
    %373 = vmatprep.subr.bf16.mxu0 0
    %374 = vmatpush1.bf16.msra.mxu0 %v361
    %375 = vmatprep.subr.bf16.mxu0 0
    %376 = vmatpush1.bf16.msra.mxu0 %v362
    %377 = vmatprep.subr.bf16.mxu0 0
    %378 = vmatpush1.bf16.msra.mxu0 %v363
    %379 = vmatprep.subr.bf16.mxu0 0
    %380 = vmatpush1.bf16.msra.mxu0 %v364
    %381 = vmatprep.subr.bf16.mxu0 0
    %382 = vmatpush1.bf16.msra.mxu0 0
    %383 = vmatprep.subr.bf16.mxu0 0
    %384 = vmatpush1.bf16.msra.mxu0 0
    %385 = vmatprep.subr.bf16.mxu0 0
    %386 = vmatpush1.bf16.msra.mxu0 0
    %387 = vmatprep.subr.bf16.mxu0 0
    %388 = vmatpush1.bf16.msra.mxu0 0
    %389 = vmatprep.subr.bf16.mxu0 0
    %390 = vmatpush1.bf16.msra.mxu0 0
    %391 = vmatprep.subr.bf16.mxu0 0
    %392 = vmatpush1.bf16.msra.mxu0 0
    %393 = vmatprep.subr.bf16.mxu0 0
    %394 = vmatpush1.bf16.msra.mxu0 0
    %395 = vmatprep.subr.bf16.mxu0 0
    %396 = vmatpush1.bf16.msra.mxu0 0
    %397 = vmatprep.subr.bf16.mxu0 0
    %398 = vmatpush1.bf16.msra.mxu0 0
    %399 = vmatprep.subr.bf16.mxu0 0
    %400 = vmatpush1.bf16.msra.mxu0 0
    %401 = vmatprep.subr.bf16.mxu0 0
    %402 = vmatpush1.bf16.msra.mxu0 0
    %403 = vmatprep.subr.bf16.mxu0 0
    %404 = vmatpush1.bf16.msra.mxu0 0
    %405 = vmatprep.mubr.bf16.mxu0 0
    %406 = vmatmul.mubr.bf16.gmra.mrb[0].mxu0 %v371
    %v407 = vpop.f32.mrb[0].mxu0
    %v408 = vadd.f32 0.0, %v407
    %v409 = vpop.f32.mrb[0].mxu0
    %v410 = vpop.f32.mrb[0].mxu0
    %v411 = vadd.f32 0.0, %v410
    %v412 = vpop.f32.mrb[0].mxu0
    %413 = vdwg.mxu0
    %v414 = vpack.c.bf16 %v411, %v408
    %v415 = vld [vmem:[#allocation11] sm:$0x1]
    %v416 = vld [vmem:[#allocation13] sm:$0x1]
    %v418 = vlaneseq
    %v419 = vshrl.u32 %v418, 7
    %v420 = vsub.s32 0, %v419
    %v421 = vrot.slane %v416, %v420
    %vm423 = vcmask 15360
    %v425 = vsel %vm423, %v414, 0
    %vm427 = vcmask 1040384
    %v429 = vsel %vm427, %v415, 0
    %431 = vmatprep.subr.bf16.mxu0 0
    %432 = vmatpush1.bf16.msra.mxu0 %v429
    %433 = vmatprep.subr.bf16.mxu0 0
    %434 = vmatpush1.bf16.msra.mxu0 0
    %435 = vmatprep.subr.bf16.mxu0 0
    %436 = vmatpush1.bf16.msra.mxu0 0
    %437 = vmatprep.subr.bf16.mxu0 0
    %438 = vmatpush1.bf16.msra.mxu0 0
    %439 = vmatprep.subr.bf16.mxu0 0
    %440 = vmatpush1.bf16.msra.mxu0 0
    %441 = vmatprep.subr.bf16.mxu0 0
    %442 = vmatpush1.bf16.msra.mxu0 0
    %443 = vmatprep.subr.bf16.mxu0 0
    %444 = vmatpush1.bf16.msra.mxu0 0
    %445 = vmatprep.subr.bf16.mxu0 0
    %446 = vmatpush1.bf16.msra.mxu0 0
    %447 = vmatprep.subr.bf16.mxu0 0
    %448 = vmatpush1.bf16.msra.mxu0 0
    %449 = vmatprep.subr.bf16.mxu0 0
    %450 = vmatpush1.bf16.msra.mxu0 0
    %451 = vmatprep.subr.bf16.mxu0 0
    %452 = vmatpush1.bf16.msra.mxu0 0
    %453 = vmatprep.subr.bf16.mxu0 0
    %454 = vmatpush1.bf16.msra.mxu0 0
    %455 = vmatprep.subr.bf16.mxu0 0
    %456 = vmatpush1.bf16.msra.mxu0 0
    %457 = vmatprep.subr.bf16.mxu0 0
    %458 = vmatpush1.bf16.msra.mxu0 0
    %459 = vmatprep.subr.bf16.mxu0 0
    %460 = vmatpush1.bf16.msra.mxu0 0
    %461 = vmatprep.subr.bf16.mxu0 0
    %462 = vmatpush1.bf16.msra.mxu0 0
    %463 = vmatprep.mubr.bf16.mxu0 0
    %464 = vmatmul.mubr.bf16.gmra.mrb[0].mxu0 %v425
    %v465 = vpop.f32.mrb[0].mxu0
    %v466 = vadd.f32 %v421, %v465
    %v467 = vpop.f32.mrb[0].mxu0
    %v468 = vpop.f32.mrb[0].mxu0
    %v469 = vadd.f32 %v421, %v468
    %v470 = vpop.f32.mrb[0].mxu0
    %471 = vdwg.mxu0
    %v472 = vmax.f32 %v466, 0.0
    %v473 = vmax.f32 %v469, 0.0
    %v474 = vand.u32 2147483647, %v466
    %v475 = vand.u32 2147483647, %v469
    %v476 = vsub.f32 0.0, %v474
    %v477 = vsub.f32 0.0, %v475
    %v478 = vmul.f32 %v476, 1.442695
    %v479 = vpow.pop %v478
    %v480 = vmul.f32 %v477, 1.442695
    %v481 = vpow.pop %v480
    %v482 = vadd.f32 %v479, 1.0
    %v483 = vadd.f32 %v481, 1.0
    %v484 = vlog2.pop %v482
    %v485 = vmul.f32 %v484, 0.6931472
    %v486 = vlog2.pop %v483
    %v487 = vmul.f32 %v486, 0.6931472
    %v488 = vadd.f32 %v472, %v485
    %v489 = vadd.f32 %v473, %v487
    %v490 = vmul.f32 %v488, %v334
    %v491 = vmul.f32 %v489, %v335
    %494 = vrot.lane.b32.xlu0 %v408, 126
    %v495 = vpop.permute.xlu0 %494
    %496 = vrot.lane.b32.xlu0 %v411, 126
    %v497 = vpop.permute.xlu0 %496
    %500 = vxpose.xlu0.b32.start [1/16] %v495, 128
    %501 = vxpose.xlu0.b32.cont [2/16] 0.0, 128
    %502 = vxpose.xlu0.b32.cont [3/16] 0.0, 128
    %503 = vxpose.xlu0.b32.cont [4/16] 0.0, 128
    %504 = vxpose.xlu0.b32.cont [5/16] 0.0, 128
    %505 = vxpose.xlu0.b32.cont [6/16] 0.0, 128
    %506 = vxpose.xlu0.b32.cont [7/16] 0.0, 128
    %507 = vxpose.xlu0.b32.cont [8/16] 0.0, 128
    %508 = vxpose.xlu0.b32.cont [9/16] 0.0, 128
    %509 = vxpose.xlu0.b32.cont [10/16] 0.0, 128
    %510 = vxpose.xlu0.b32.cont [11/16] 0.0, 128
    %511 = vxpose.xlu0.b32.cont [12/16] 0.0, 128
    %512 = vxpose.xlu0.b32.cont [13/16] 0.0, 128
    %513 = vxpose.xlu0.b32.cont [14/16] 0.0, 128
    %514 = vxpose.xlu0.b32.cont [15/16] 0.0, 128
    %515 = vxpose.xlu0.b32.end [16/16] 0.0, 128
    %v516 = vpop.trf.xlu0
    %v517 = vpop.trf.xlu0
    %v518 = vpop.trf.xlu0
    %v519 = vpop.trf.xlu0
    %v520 = vpop.trf.xlu0
    %v521 = vpop.trf.xlu0
    %v522 = vpop.trf.xlu0
    %v523 = vpop.trf.xlu0
    %v524 = vpop.trf.xlu0
    %v525 = vpop.trf.xlu0
    %v526 = vpop.trf.xlu0
    %v527 = vpop.trf.xlu0
    %v528 = vpop.trf.xlu0
    %v529 = vpop.trf.xlu0
    %v530 = vpop.trf.xlu0
    %v531 = vpop.trf.xlu0
    %532 = vxpose.xlu0.b32.start [1/16] %v497, 128
    %533 = vxpose.xlu0.b32.cont [2/16] 0.0, 128
    %534 = vxpose.xlu0.b32.cont [3/16] 0.0, 128
    %535 = vxpose.xlu0.b32.cont [4/16] 0.0, 128
    %536 = vxpose.xlu0.b32.cont [5/16] 0.0, 128
    %537 = vxpose.xlu0.b32.cont [6/16] 0.0, 128
    %538 = vxpose.xlu0.b32.cont [7/16] 0.0, 128
    %539 = vxpose.xlu0.b32.cont [8/16] 0.0, 128
    %540 = vxpose.xlu0.b32.cont [9/16] 0.0, 128
    %541 = vxpose.xlu0.b32.cont [10/16] 0.0, 128
    %542 = vxpose.xlu0.b32.cont [11/16] 0.0, 128
    %543 = vxpose.xlu0.b32.cont [12/16] 0.0, 128
    %544 = vxpose.xlu0.b32.cont [13/16] 0.0, 128
    %545 = vxpose.xlu0.b32.cont [14/16] 0.0, 128
    %546 = vxpose.xlu0.b32.cont [15/16] 0.0, 128
    %547 = vxpose.xlu0.b32.end [16/16] 0.0, 128
    %v548 = vpop.trf.xlu0
    %v549 = vpop.trf.xlu0
    %v550 = vpop.trf.xlu0
    %v551 = vpop.trf.xlu0
    %v552 = vpop.trf.xlu0
    %v553 = vpop.trf.xlu0
    %v554 = vpop.trf.xlu0
    %v555 = vpop.trf.xlu0
    %v556 = vpop.trf.xlu0
    %v557 = vpop.trf.xlu0
    %v558 = vpop.trf.xlu0
    %v559 = vpop.trf.xlu0
    %v560 = vpop.trf.xlu0
    %v561 = vpop.trf.xlu0
    %v562 = vpop.trf.xlu0
    %v563 = vpop.trf.xlu0
    %564 = vrot.lane.b32.xlu0 %v408, 110
    %v565 = vpop.permute.xlu0 %564
    %566 = vrot.lane.b32.xlu0 %v411, 110
    %v567 = vpop.permute.xlu0 %566
    %570 = vxpose.xlu0.b32.start [1/16] %v565, 128
    %571 = vxpose.xlu0.b32.cont [2/16] 0.0, 128
    %572 = vxpose.xlu0.b32.cont [3/16] 0.0, 128
    %573 = vxpose.xlu0.b32.cont [4/16] 0.0, 128
    %574 = vxpose.xlu0.b32.cont [5/16] 0.0, 128
    %575 = vxpose.xlu0.b32.cont [6/16] 0.0, 128
    %576 = vxpose.xlu0.b32.cont [7/16] 0.0, 128
    %577 = vxpose.xlu0.b32.cont [8/16] 0.0, 128
    %578 = vxpose.xlu0.b32.cont [9/16] 0.0, 128
    %579 = vxpose.xlu0.b32.cont [10/16] 0.0, 128
    %580 = vxpose.xlu0.b32.cont [11/16] 0.0, 128
    %581 = vxpose.xlu0.b32.cont [12/16] 0.0, 128
    %582 = vxpose.xlu0.b32.cont [13/16] 0.0, 128
    %583 = vxpose.xlu0.b32.cont [14/16] 0.0, 128
    %584 = vxpose.xlu0.b32.cont [15/16] 0.0, 128
    %585 = vxpose.xlu0.b32.end [16/16] 0.0, 128
    %v586 = vpop.trf.xlu0
    %v587 = vpop.trf.xlu0
    %v588 = vpop.trf.xlu0
    %v589 = vpop.trf.xlu0
    %v590 = vpop.trf.xlu0
    %v591 = vpop.trf.xlu0
    %v592 = vpop.trf.xlu0
    %v593 = vpop.trf.xlu0
    %v594 = vpop.trf.xlu0
    %v595 = vpop.trf.xlu0
    %v596 = vpop.trf.xlu0
    %v597 = vpop.trf.xlu0
    %v598 = vpop.trf.xlu0
    %v599 = vpop.trf.xlu0
    %v600 = vpop.trf.xlu0
    %v601 = vpop.trf.xlu0
    %602 = vxpose.xlu0.b32.start [1/16] %v567, 128
    %603 = vxpose.xlu0.b32.cont [2/16] 0.0, 128
    %604 = vxpose.xlu0.b32.cont [3/16] 0.0, 128
    %605 = vxpose.xlu0.b32.cont [4/16] 0.0, 128
    %606 = vxpose.xlu0.b32.cont [5/16] 0.0, 128
    %607 = vxpose.xlu0.b32.cont [6/16] 0.0, 128
    %608 = vxpose.xlu0.b32.cont [7/16] 0.0, 128
    %609 = vxpose.xlu0.b32.cont [8/16] 0.0, 128
    %610 = vxpose.xlu0.b32.cont [9/16] 0.0, 128
    %611 = vxpose.xlu0.b32.cont [10/16] 0.0, 128
    %612 = vxpose.xlu0.b32.cont [11/16] 0.0, 128
    %613 = vxpose.xlu0.b32.cont [12/16] 0.0, 128
    %614 = vxpose.xlu0.b32.cont [13/16] 0.0, 128
    %615 = vxpose.xlu0.b32.cont [14/16] 0.0, 128
    %616 = vxpose.xlu0.b32.cont [15/16] 0.0, 128
    %617 = vxpose.xlu0.b32.end [16/16] 0.0, 128
    %v618 = vpop.trf.xlu0
    %v619 = vpop.trf.xlu0
    %v620 = vpop.trf.xlu0
    %v621 = vpop.trf.xlu0
    %v622 = vpop.trf.xlu0
    %v623 = vpop.trf.xlu0
    %v624 = vpop.trf.xlu0
    %v625 = vpop.trf.xlu0
    %v626 = vpop.trf.xlu0
    %v627 = vpop.trf.xlu0
    %v628 = vpop.trf.xlu0
    %v629 = vpop.trf.xlu0
    %v630 = vpop.trf.xlu0
    %v631 = vpop.trf.xlu0
    %v632 = vpop.trf.xlu0
    %v633 = vpop.trf.xlu0
    %v634 = vld [vmem:[#allocation14] sm:$0xff]
    %v635 = vld [vmem:[#allocation14 + $0x8] sm:$0xff]
    %v638 = vcombine.high %v488, %v488
    %v640 = vunpack.c.l.s4 1966171168
    %v641 = vunpack.c.0.s8 %v640
    %v642 = vlaneseq
    %v643 = vshrl.u32 %v642, 7
    %v644 = vsub.s32 %v641, %v643
    %v645 = vrot.slane %v488, %v644
    %v647 = vunpack.c.l.s4 1966171168
    %v648 = vunpack.c.0.s8 %v647
    %v649 = vlaneseq
    %v650 = vshrl.u32 %v649, 7
    %v651 = vsub.s32 %v648, %v650
    %v652 = vrot.slane %v638, %v651
    %v653 = vcombine.high %v645, %v645
    %v654 = vcombine.high %v652, %v652
    %v656 = vunpack.c.l.s4 1966171168
    %v657 = vunpack.c.0.s8 %v656
    %v658 = vlaneseq
    %v659 = vshrl.u32 %v658, 7
    %v660 = vsub.s32 %v657, %v659
    %v661 = vrot.slane %v645, %v660
    %v663 = vunpack.c.l.s4 1966171168
    %v664 = vunpack.c.0.s8 %v663
    %v665 = vlaneseq
    %v666 = vshrl.u32 %v665, 7
    %v667 = vsub.s32 %v664, %v666
    %v668 = vrot.slane %v652, %v667
    %v670 = vunpack.c.l.s4 1966171168
    %v671 = vunpack.c.0.s8 %v670
    %v672 = vlaneseq
    %v673 = vshrl.u32 %v672, 7
    %v674 = vsub.s32 %v671, %v673
    %v675 = vrot.slane %v653, %v674
    %v677 = vunpack.c.l.s4 1966171168
    %v678 = vunpack.c.0.s8 %v677
    %v679 = vlaneseq
    %v680 = vshrl.u32 %v679, 7
    %v681 = vsub.s32 %v678, %v680
    %v682 = vrot.slane %v654, %v681
    %v683 = vcombine.high %v661, %v661
    %v684 = vcombine.high %v668, %v668
    %v685 = vcombine.high %v675, %v675
    %v686 = vcombine.high %v682, %v682
    %v687 = vcombine.high %v489, %v489
    %v689 = vunpack.c.l.s4 1966171168
    %v690 = vunpack.c.0.s8 %v689
    %v691 = vlaneseq
    %v692 = vshrl.u32 %v691, 7
    %v693 = vsub.s32 %v690, %v692
    %v694 = vrot.slane %v489, %v693
    %v696 = vunpack.c.l.s4 1966171168
    %v697 = vunpack.c.0.s8 %v696
    %v698 = vlaneseq
    %v699 = vshrl.u32 %v698, 7
    %v700 = vsub.s32 %v697, %v699
    %v701 = vrot.slane %v687, %v700
    %v702 = vcombine.high %v694, %v694
    %v703 = vcombine.high %v701, %v701
    %v705 = vunpack.c.l.s4 1966171168
    %v706 = vunpack.c.0.s8 %v705
    %v707 = vlaneseq
    %v708 = vshrl.u32 %v707, 7
    %v709 = vsub.s32 %v706, %v708
    %v710 = vrot.slane %v694, %v709
    %v712 = vunpack.c.l.s4 1966171168
    %v713 = vunpack.c.0.s8 %v712
    %v714 = vlaneseq
    %v715 = vshrl.u32 %v714, 7
    %v716 = vsub.s32 %v713, %v715
    %v717 = vrot.slane %v701, %v716
    %v719 = vunpack.c.l.s4 1966171168
    %v720 = vunpack.c.0.s8 %v719
    %v721 = vlaneseq
    %v722 = vshrl.u32 %v721, 7
    %v723 = vsub.s32 %v720, %v722
    %v724 = vrot.slane %v702, %v723
    %v726 = vunpack.c.l.s4 1966171168
    %v727 = vunpack.c.0.s8 %v726
    %v728 = vlaneseq
    %v729 = vshrl.u32 %v728, 7
    %v730 = vsub.s32 %v727, %v729
    %v731 = vrot.slane %v703, %v730
    %v732 = vcombine.high %v710, %v710
    %v733 = vcombine.high %v717, %v717
    %v734 = vcombine.high %v724, %v724
    %v735 = vcombine.high %v731, %v731
    %v736 = vlaneseq
    %v737 = vshrl.u32 %v736, 7
    %v738 = vsub.s32 0, %v737
    %v739 = vrot.slane %v661, %v738
    %v740 = vlaneseq
    %v741 = vshrl.u32 %v740, 7
    %v742 = vsub.s32 0, %v741
    %v743 = vrot.slane %v675, %v742
    %v744 = vlaneseq
    %v745 = vshrl.u32 %v744, 7
    %v746 = vsub.s32 0, %v745
    %v747 = vrot.slane %v683, %v746
    %v748 = vlaneseq
    %v749 = vshrl.u32 %v748, 7
    %v750 = vsub.s32 0, %v749
    %v751 = vrot.slane %v685, %v750
    %v752 = vlaneseq
    %v753 = vshrl.u32 %v752, 7
    %v754 = vsub.s32 0, %v753
    %v755 = vrot.slane %v668, %v754
    %v756 = vlaneseq
    %v757 = vshrl.u32 %v756, 7
    %v758 = vsub.s32 0, %v757
    %v759 = vrot.slane %v682, %v758
    %v760 = vlaneseq
    %v761 = vshrl.u32 %v760, 7
    %v762 = vsub.s32 0, %v761
    %v763 = vrot.slane %v684, %v762
    %v764 = vlaneseq
    %v765 = vshrl.u32 %v764, 7
    %v766 = vsub.s32 0, %v765
    %v767 = vrot.slane %v686, %v766
    %v768 = vlaneseq
    %v769 = vshrl.u32 %v768, 7
    %v770 = vsub.s32 0, %v769
    %v771 = vrot.slane %v710, %v770
    %v772 = vlaneseq
    %v773 = vshrl.u32 %v772, 7
    %v774 = vsub.s32 0, %v773
    %v775 = vrot.slane %v724, %v774
    %v776 = vlaneseq
    %v777 = vshrl.u32 %v776, 7
    %v778 = vsub.s32 0, %v777
    %v779 = vrot.slane %v732, %v778
    %v780 = vlaneseq
    %v781 = vshrl.u32 %v780, 7
    %v782 = vsub.s32 0, %v781
    %v783 = vrot.slane %v734, %v782
    %v784 = vlaneseq
    %v785 = vshrl.u32 %v784, 7
    %v786 = vsub.s32 0, %v785
    %v787 = vrot.slane %v717, %v786
    %v788 = vlaneseq
    %v789 = vshrl.u32 %v788, 7
    %v790 = vsub.s32 0, %v789
    %v791 = vrot.slane %v731, %v790
    %v792 = vlaneseq
    %v793 = vshrl.u32 %v792, 7
    %v794 = vsub.s32 0, %v793
    %v795 = vrot.slane %v733, %v794
    %v796 = vlaneseq
    %v797 = vshrl.u32 %v796, 7
    %v798 = vsub.s32 0, %v797
    %v799 = vrot.slane %v735, %v798
    %v816 = vmul.f32 %v739, %v634
    %v817 = vmul.f32 %v739, %v635
    %v818 = vmul.f32 %v743, %v634
    %v819 = vmul.f32 %v743, %v635
    %v820 = vmul.f32 %v747, %v634
    %v821 = vmul.f32 %v747, %v635
    %v822 = vmul.f32 %v751, %v634
    %v823 = vmul.f32 %v751, %v635
    %v824 = vmul.f32 %v755, %v634
    %v825 = vmul.f32 %v755, %v635
    %v826 = vmul.f32 %v759, %v634
    %v827 = vmul.f32 %v759, %v635
    %v828 = vmul.f32 %v763, %v634
    %v829 = vmul.f32 %v763, %v635
    %v830 = vmul.f32 %v767, %v634
    %v831 = vmul.f32 %v767, %v635
    %v832 = vmul.f32 %v771, %v634
    %v833 = vmul.f32 %v771, %v635
    %v834 = vmul.f32 %v775, %v634
    %v835 = vmul.f32 %v775, %v635
    %v836 = vmul.f32 %v779, %v634
    %v837 = vmul.f32 %v779, %v635
    %v838 = vmul.f32 %v783, %v634
    %v839 = vmul.f32 %v783, %v635
    %v840 = vmul.f32 %v787, %v634
    %v841 = vmul.f32 %v787, %v635
    %v842 = vmul.f32 %v791, %v634
    %v843 = vmul.f32 %v791, %v635
    %v844 = vmul.f32 %v795, %v634
    %v845 = vmul.f32 %v795, %v635
    %v846 = vmul.f32 %v799, %v634
    %v847 = vmul.f32 %v799, %v635
    %v848 = vmul.f32 %v816, 1.442695
    %v849 = vpow.pop %v848
    %v850 = vmul.f32 %v817, 1.442695
    %v851 = vpow.pop %v850
    %v852 = vmul.f32 %v818, 1.442695
    %v853 = vpow.pop %v852
    %v854 = vmul.f32 %v819, 1.442695
    %v855 = vpow.pop %v854
    %v856 = vmul.f32 %v820, 1.442695
    %v857 = vpow.pop %v856
    %v858 = vmul.f32 %v821, 1.442695
    %v859 = vpow.pop %v858
    %v860 = vmul.f32 %v822, 1.442695
    %v861 = vpow.pop %v860
    %v862 = vmul.f32 %v823, 1.442695
    %v863 = vpow.pop %v862
    %v864 = vmul.f32 %v824, 1.442695
    %v865 = vpow.pop %v864
    %v866 = vmul.f32 %v825, 1.442695
    %v867 = vpow.pop %v866
    %v868 = vmul.f32 %v826, 1.442695
    %v869 = vpow.pop %v868
    %v870 = vmul.f32 %v827, 1.442695
    %v871 = vpow.pop %v870
    %v872 = vmul.f32 %v828, 1.442695
    %v873 = vpow.pop %v872
    %v874 = vmul.f32 %v829, 1.442695
    %v875 = vpow.pop %v874
    %v876 = vmul.f32 %v830, 1.442695
    %v877 = vpow.pop %v876
    %v878 = vmul.f32 %v831, 1.442695
    %v879 = vpow.pop %v878
    %v880 = vmul.f32 %v832, 1.442695
    %v881 = vpow.pop %v880
    %v882 = vmul.f32 %v833, 1.442695
    %v883 = vpow.pop %v882
    %v884 = vmul.f32 %v834, 1.442695
    %v885 = vpow.pop %v884
    %v886 = vmul.f32 %v835, 1.442695
    %v887 = vpow.pop %v886
    %v888 = vmul.f32 %v836, 1.442695
    %v889 = vpow.pop %v888
    %v890 = vmul.f32 %v837, 1.442695
    %v891 = vpow.pop %v890
    %v892 = vmul.f32 %v838, 1.442695
    %v893 = vpow.pop %v892
    %v894 = vmul.f32 %v839, 1.442695
    %v895 = vpow.pop %v894
    %v896 = vmul.f32 %v840, 1.442695
    %v897 = vpow.pop %v896
    %v898 = vmul.f32 %v841, 1.442695
    %v899 = vpow.pop %v898
    %v900 = vmul.f32 %v842, 1.442695
    %v901 = vpow.pop %v900
    %v902 = vmul.f32 %v843, 1.442695
    %v903 = vpow.pop %v902
    %v904 = vmul.f32 %v844, 1.442695
    %v905 = vpow.pop %v904
    %v906 = vmul.f32 %v845, 1.442695
    %v907 = vpow.pop %v906
    %v908 = vmul.f32 %v846, 1.442695
    %v909 = vpow.pop %v908
    %v910 = vmul.f32 %v847, 1.442695
    %v911 = vpow.pop %v910
    %913 = vset.pattern.permute.xlu0 0
    %914 = vperm.xlu0 %913, %v516
    %v915 = vpop.permute.xlu0 %914
    %918 = vset.pattern.permute.xlu0 0
    %919 = vperm.xlu0 %918, %v517
    %v920 = vpop.permute.xlu0 %919
    %923 = vset.pattern.permute.xlu0 0
    %924 = vperm.xlu0 %923, %v548
    %v925 = vpop.permute.xlu0 %924
    %928 = vset.pattern.permute.xlu0 0
    %929 = vperm.xlu0 %928, %v549
    %v930 = vpop.permute.xlu0 %929
    %v932 = vlaneseq
    %v933 = vshrl.u32 %v932, 7
    %v934 = vsub.s32 0, %v933
    %v935 = vrot.slane %v490, %v934
    %v936 = vlaneseq
    %v937 = vshrl.u32 %v936, 7
    %v938 = vsub.s32 0, %v937
    %v939 = vrot.slane %v491, %v938
    %v940 = vmul.f32 %v915, %v935
    %v941 = vmul.f32 %v920, %v935
    %v942 = vmul.f32 %v925, %v939
    %v943 = vmul.f32 %v930, %v939
    %v944 = vmul.f32 %v849, 0.0
    %v945 = vmul.f32 %v851, 0.0
    %v946 = vmul.f32 %v881, 0.0
    %v947 = vmul.f32 %v883, 0.0
    %v948 = vadd.f32 %v944, %v940
    %v949 = vadd.f32 %v945, %v941
    %v950 = vadd.f32 %v946, %v942
    %v951 = vadd.f32 %v947, %v943
    %953 = vset.pattern.permute.xlu0 0
    %954 = vperm.xlu0 %953, %v586
    %v955 = vpop.permute.xlu0 %954
    %958 = vset.pattern.permute.xlu0 0
    %959 = vperm.xlu0 %958, %v587
    %v960 = vpop.permute.xlu0 %959
    %963 = vset.pattern.permute.xlu0 0
    %964 = vperm.xlu0 %963, %v618
    %v965 = vpop.permute.xlu0 %964
    %968 = vset.pattern.permute.xlu0 0
    %969 = vperm.xlu0 %968, %v619
    %v970 = vpop.permute.xlu0 %969
    %v972 = vmul.f32 %v955, %v948
    %v973 = vmul.f32 %v960, %v949
    %v974 = vmul.f32 %v965, %v950
    %v975 = vmul.f32 %v970, %v951
    %v976 = vsel %vm369, %v972, 0.0
    %v977 = vsel %vm369, %v973, 0.0
    %v978 = vadd.f32 %v976, %v977
    %v979 = vrot.slane %v978, 4
    %v980 = vadd.f32 %v978, %v979
    %v981 = vrot.slane %v980, 2
    %v982 = vadd.f32 %v980, %v981
    %v983 = vrot.slane %v982, 1
    %v984 = vadd.f32 %v982, %v983
    %v985 = vsel %vm369, %v974, 0.0
    %v986 = vsel %vm369, %v975, 0.0
    %v987 = vadd.f32 %v985, %v986
    %v988 = vrot.slane %v987, 4
    %v989 = vadd.f32 %v987, %v988
    %v990 = vrot.slane %v989, 2
    %v991 = vadd.f32 %v989, %v990
    %v992 = vrot.slane %v991, 1
    %v993 = vadd.f32 %v991, %v992
    %994 = vset.pattern.permute.xlu0 1
    %995 = vperm.xlu0 %994, %v516
    %v996 = vpop.permute.xlu0 %995
    %998 = vset.pattern.permute.xlu0 1
    %999 = vperm.xlu0 %998, %v517
    %v1000 = vpop.permute.xlu0 %999
    %1002 = vset.pattern.permute.xlu0 1
    %1003 = vperm.xlu0 %1002, %v548
    %v1004 = vpop.permute.xlu0 %1003
    %1006 = vset.pattern.permute.xlu0 1
    %1007 = vperm.xlu0 %1006, %v549
    %v1008 = vpop.permute.xlu0 %1007
    %v1010 = vlaneseq
    %v1011 = vshrl.u32 %v1010, 7
    %v1012 = vsub.s32 1, %v1011
    %v1013 = vrot.slane %v490, %v1012
    %v1014 = vlaneseq
    %v1015 = vshrl.u32 %v1014, 7
    %v1016 = vsub.s32 1, %v1015
    %v1017 = vrot.slane %v491, %v1016
    %v1018 = vmul.f32 %v996, %v1013
    %v1019 = vmul.f32 %v1000, %v1013
    %v1020 = vmul.f32 %v1004, %v1017
    %v1021 = vmul.f32 %v1008, %v1017
    %v1022 = vmul.f32 %v853, %v948
    %v1023 = vmul.f32 %v855, %v949
    %v1024 = vmul.f32 %v885, %v950
    %v1025 = vmul.f32 %v887, %v951
    %v1026 = vadd.f32 %v1022, %v1018
    %v1027 = vadd.f32 %v1023, %v1019
    %v1028 = vadd.f32 %v1024, %v1020
    %v1029 = vadd.f32 %v1025, %v1021
    %1030 = vset.pattern.permute.xlu0 1
    %1031 = vperm.xlu0 %1030, %v586
    %v1032 = vpop.permute.xlu0 %1031
    %1034 = vset.pattern.permute.xlu0 1
    %1035 = vperm.xlu0 %1034, %v587
    %v1036 = vpop.permute.xlu0 %1035
    %1038 = vset.pattern.permute.xlu0 1
    %1039 = vperm.xlu0 %1038, %v618
    %v1040 = vpop.permute.xlu0 %1039
    %1042 = vset.pattern.permute.xlu0 1
    %1043 = vperm.xlu0 %1042, %v619
    %v1044 = vpop.permute.xlu0 %1043
    %v1046 = vmul.f32 %v1032, %v1026
    %v1047 = vmul.f32 %v1036, %v1027
    %v1048 = vmul.f32 %v1040, %v1028
    %v1049 = vmul.f32 %v1044, %v1029
    %v1050 = vsel %vm369, %v1046, 0.0
    %v1051 = vsel %vm369, %v1047, 0.0
    %v1052 = vadd.f32 %v1050, %v1051
    %v1053 = vrot.slane %v1052, 4
    %v1054 = vadd.f32 %v1052, %v1053
    %v1055 = vrot.slane %v1054, 2
    %v1056 = vadd.f32 %v1054, %v1055
    %v1057 = vrot.slane %v1056, 1
    %v1058 = vadd.f32 %v1056, %v1057
    %v1059 = vsel %vm369, %v1048, 0.0
    %v1060 = vsel %vm369, %v1049, 0.0
    %v1061 = vadd.f32 %v1059, %v1060
    %v1062 = vrot.slane %v1061, 4
    %v1063 = vadd.f32 %v1061, %v1062
    %v1064 = vrot.slane %v1063, 2
    %v1065 = vadd.f32 %v1063, %v1064
    %v1066 = vrot.slane %v1065, 1
    %v1067 = vadd.f32 %v1065, %v1066
    %1068 = vset.pattern.permute.xlu0 2
    %1069 = vperm.xlu0 %1068, %v516
    %v1070 = vpop.permute.xlu0 %1069
    %1072 = vset.pattern.permute.xlu0 2
    %1073 = vperm.xlu0 %1072, %v517
    %v1074 = vpop.permute.xlu0 %1073
    %1076 = vset.pattern.permute.xlu0 2
    %1077 = vperm.xlu0 %1076, %v548
    %v1078 = vpop.permute.xlu0 %1077
    %1080 = vset.pattern.permute.xlu0 2
    %1081 = vperm.xlu0 %1080, %v549
    %v1082 = vpop.permute.xlu0 %1081
    %v1084 = vlaneseq
    %v1085 = vshrl.u32 %v1084, 7
    %v1086 = vsub.s32 2, %v1085
    %v1087 = vrot.slane %v490, %v1086
    %v1088 = vlaneseq
    %v1089 = vshrl.u32 %v1088, 7
    %v1090 = vsub.s32 2, %v1089
    %v1091 = vrot.slane %v491, %v1090
    %v1092 = vmul.f32 %v1070, %v1087
    %v1093 = vmul.f32 %v1074, %v1087
    %v1094 = vmul.f32 %v1078, %v1091
    %v1095 = vmul.f32 %v1082, %v1091
    %v1096 = vmul.f32 %v857, %v1026
    %v1097 = vmul.f32 %v859, %v1027
    %v1098 = vmul.f32 %v889, %v1028
    %v1099 = vmul.f32 %v891, %v1029
    %v1100 = vadd.f32 %v1096, %v1092
    %v1101 = vadd.f32 %v1097, %v1093
    %v1102 = vadd.f32 %v1098, %v1094
    %v1103 = vadd.f32 %v1099, %v1095
    %1104 = vset.pattern.permute.xlu0 2
    %1105 = vperm.xlu0 %1104, %v586
    %v1106 = vpop.permute.xlu0 %1105
    %1108 = vset.pattern.permute.xlu0 2
    %1109 = vperm.xlu0 %1108, %v587
    %v1110 = vpop.permute.xlu0 %1109
    %1112 = vset.pattern.permute.xlu0 2
    %1113 = vperm.xlu0 %1112, %v618
    %v1114 = vpop.permute.xlu0 %1113
    %1116 = vset.pattern.permute.xlu0 2
    %1117 = vperm.xlu0 %1116, %v619
    %v1118 = vpop.permute.xlu0 %1117
    %v1120 = vmul.f32 %v1106, %v1100
    %v1121 = vmul.f32 %v1110, %v1101
    %v1122 = vmul.f32 %v1114, %v1102
    %v1123 = vmul.f32 %v1118, %v1103
    %v1124 = vsel %vm369, %v1120, 0.0
    %v1125 = vsel %vm369, %v1121, 0.0
    %v1126 = vadd.f32 %v1124, %v1125
    %v1127 = vrot.slane %v1126, 4
    %v1128 = vadd.f32 %v1126, %v1127
    %v1129 = vrot.slane %v1128, 2
    %v1130 = vadd.f32 %v1128, %v1129
    %v1131 = vrot.slane %v1130, 1
    %v1132 = vadd.f32 %v1130, %v1131
    %v1133 = vsel %vm369, %v1122, 0.0
    %v1134 = vsel %vm369, %v1123, 0.0
    %v1135 = vadd.f32 %v1133, %v1134
    %v1136 = vrot.slane %v1135, 4
    %v1137 = vadd.f32 %v1135, %v1136
    %v1138 = vrot.slane %v1137, 2
    %v1139 = vadd.f32 %v1137, %v1138
    %v1140 = vrot.slane %v1139, 1
    %v1141 = vadd.f32 %v1139, %v1140
    %1142 = vset.pattern.permute.xlu0 3
    %1143 = vperm.xlu0 %1142, %v516
    %v1144 = vpop.permute.xlu0 %1143
    %1146 = vset.pattern.permute.xlu0 3
    %1147 = vperm.xlu0 %1146, %v517
    %v1148 = vpop.permute.xlu0 %1147
    %1150 = vset.pattern.permute.xlu0 3
    %1151 = vperm.xlu0 %1150, %v548
    %v1152 = vpop.permute.xlu0 %1151
    %1154 = vset.pattern.permute.xlu0 3
    %1155 = vperm.xlu0 %1154, %v549
    %v1156 = vpop.permute.xlu0 %1155
    %v1158 = vlaneseq
    %v1159 = vshrl.u32 %v1158, 7
    %v1160 = vsub.s32 3, %v1159
    %v1161 = vrot.slane %v490, %v1160
    %v1162 = vlaneseq
    %v1163 = vshrl.u32 %v1162, 7
    %v1164 = vsub.s32 3, %v1163
    %v1165 = vrot.slane %v491, %v1164
    %v1166 = vmul.f32 %v1144, %v1161
    %v1167 = vmul.f32 %v1148, %v1161
    %v1168 = vmul.f32 %v1152, %v1165
    %v1169 = vmul.f32 %v1156, %v1165
    %v1170 = vmul.f32 %v861, %v1100
    %v1171 = vmul.f32 %v863, %v1101
    %v1172 = vmul.f32 %v893, %v1102
    %v1173 = vmul.f32 %v895, %v1103
    %v1174 = vadd.f32 %v1170, %v1166
    %v1175 = vadd.f32 %v1171, %v1167
    %v1176 = vadd.f32 %v1172, %v1168
    %v1177 = vadd.f32 %v1173, %v1169
    %1178 = vset.pattern.permute.xlu0 3
    %1179 = vperm.xlu0 %1178, %v586
    %v1180 = vpop.permute.xlu0 %1179
    %1182 = vset.pattern.permute.xlu0 3
    %1183 = vperm.xlu0 %1182, %v587
    %v1184 = vpop.permute.xlu0 %1183
    %1186 = vset.pattern.permute.xlu0 3
    %1187 = vperm.xlu0 %1186, %v618
    %v1188 = vpop.permute.xlu0 %1187
    %1190 = vset.pattern.permute.xlu0 3
    %1191 = vperm.xlu0 %1190, %v619
    %v1192 = vpop.permute.xlu0 %1191
    %v1194 = vmul.f32 %v1180, %v1174
    %v1195 = vmul.f32 %v1184, %v1175
    %v1196 = vmul.f32 %v1188, %v1176
    %v1197 = vmul.f32 %v1192, %v1177
    %v1198 = vsel %vm369, %v1194, 0.0
    %v1199 = vsel %vm369, %v1195, 0.0
    %v1200 = vadd.f32 %v1198, %v1199
    %v1201 = vrot.slane %v1200, 4
    %v1202 = vadd.f32 %v1200, %v1201
    %v1203 = vrot.slane %v1202, 2
    %v1204 = vadd.f32 %v1202, %v1203
    %v1205 = vrot.slane %v1204, 1
    %v1206 = vadd.f32 %v1204, %v1205
    %v1207 = vsel %vm369, %v1196, 0.0
    %v1208 = vsel %vm369, %v1197, 0.0
    %v1209 = vadd.f32 %v1207, %v1208
    %v1210 = vrot.slane %v1209, 4
    %v1211 = vadd.f32 %v1209, %v1210
    %v1212 = vrot.slane %v1211, 2
    %v1213 = vadd.f32 %v1211, %v1212
    %v1214 = vrot.slane %v1213, 1
    %v1215 = vadd.f32 %v1213, %v1214
    %1216 = vset.pattern.permute.xlu0 4
    %1217 = vperm.xlu0 %1216, %v516
    %v1218 = vpop.permute.xlu0 %1217
    %1220 = vset.pattern.permute.xlu0 4
    %1221 = vperm.xlu0 %1220, %v517
    %v1222 = vpop.permute.xlu0 %1221
    %1224 = vset.pattern.permute.xlu0 4
    %1225 = vperm.xlu0 %1224, %v548
    %v1226 = vpop.permute.xlu0 %1225
    %1228 = vset.pattern.permute.xlu0 4
    %1229 = vperm.xlu0 %1228, %v549
    %v1230 = vpop.permute.xlu0 %1229
    %v1232 = vlaneseq
    %v1233 = vshrl.u32 %v1232, 7
    %v1234 = vsub.s32 4, %v1233
    %v1235 = vrot.slane %v490, %v1234
    %v1236 = vlaneseq
    %v1237 = vshrl.u32 %v1236, 7
    %v1238 = vsub.s32 4, %v1237
    %v1239 = vrot.slane %v491, %v1238
    %v1240 = vmul.f32 %v1218, %v1235
    %v1241 = vmul.f32 %v1222, %v1235
    %v1242 = vmul.f32 %v1226, %v1239
    %v1243 = vmul.f32 %v1230, %v1239
    %v1244 = vmul.f32 %v865, %v1174
    %v1245 = vmul.f32 %v867, %v1175
    %v1246 = vmul.f32 %v897, %v1176
    %v1247 = vmul.f32 %v899, %v1177
    %v1248 = vadd.f32 %v1244, %v1240
    %v1249 = vadd.f32 %v1245, %v1241
    %v1250 = vadd.f32 %v1246, %v1242
    %v1251 = vadd.f32 %v1247, %v1243
    %1252 = vset.pattern.permute.xlu0 4
    %1253 = vperm.xlu0 %1252, %v586
    %v1254 = vpop.permute.xlu0 %1253
    %1256 = vset.pattern.permute.xlu0 4
    %1257 = vperm.xlu0 %1256, %v587
    %v1258 = vpop.permute.xlu0 %1257
    %1260 = vset.pattern.permute.xlu0 4
    %1261 = vperm.xlu0 %1260, %v618
    %v1262 = vpop.permute.xlu0 %1261
    %1264 = vset.pattern.permute.xlu0 4
    %1265 = vperm.xlu0 %1264, %v619
    %v1266 = vpop.permute.xlu0 %1265
    %v1268 = vmul.f32 %v1254, %v1248
    %v1269 = vmul.f32 %v1258, %v1249
    %v1270 = vmul.f32 %v1262, %v1250
    %v1271 = vmul.f32 %v1266, %v1251
    %v1272 = vsel %vm369, %v1268, 0.0
    %v1273 = vsel %vm369, %v1269, 0.0
    %v1274 = vadd.f32 %v1272, %v1273
    %v1275 = vrot.slane %v1274, 4
    %v1276 = vadd.f32 %v1274, %v1275
    %v1277 = vrot.slane %v1276, 2
    %v1278 = vadd.f32 %v1276, %v1277
    %v1279 = vrot.slane %v1278, 1
    %v1280 = vadd.f32 %v1278, %v1279
    %v1281 = vsel %vm369, %v1270, 0.0
    %v1282 = vsel %vm369, %v1271, 0.0
    %v1283 = vadd.f32 %v1281, %v1282
    %v1284 = vrot.slane %v1283, 4
    %v1285 = vadd.f32 %v1283, %v1284
    %v1286 = vrot.slane %v1285, 2
    %v1287 = vadd.f32 %v1285, %v1286
    %v1288 = vrot.slane %v1287, 1
    %v1289 = vadd.f32 %v1287, %v1288
    %1290 = vset.pattern.permute.xlu0 5
    %1291 = vperm.xlu0 %1290, %v516
    %v1292 = vpop.permute.xlu0 %1291
    %1294 = vset.pattern.permute.xlu0 5
    %1295 = vperm.xlu0 %1294, %v517
    %v1296 = vpop.permute.xlu0 %1295
    %1298 = vset.pattern.permute.xlu0 5
    %1299 = vperm.xlu0 %1298, %v548
    %v1300 = vpop.permute.xlu0 %1299
    %1302 = vset.pattern.permute.xlu0 5
    %1303 = vperm.xlu0 %1302, %v549
    %v1304 = vpop.permute.xlu0 %1303
    %v1306 = vlaneseq
    %v1307 = vshrl.u32 %v1306, 7
    %v1308 = vsub.s32 5, %v1307
    %v1309 = vrot.slane %v490, %v1308
    %v1310 = vlaneseq
    %v1311 = vshrl.u32 %v1310, 7
    %v1312 = vsub.s32 5, %v1311
    %v1313 = vrot.slane %v491, %v1312
    %v1314 = vmul.f32 %v1292, %v1309
    %v1315 = vmul.f32 %v1296, %v1309
    %v1316 = vmul.f32 %v1300, %v1313
    %v1317 = vmul.f32 %v1304, %v1313
    %v1318 = vmul.f32 %v869, %v1248
    %v1319 = vmul.f32 %v871, %v1249
    %v1320 = vmul.f32 %v901, %v1250
    %v1321 = vmul.f32 %v903, %v1251
    %v1322 = vadd.f32 %v1318, %v1314
    %v1323 = vadd.f32 %v1319, %v1315
    %v1324 = vadd.f32 %v1320, %v1316
    %v1325 = vadd.f32 %v1321, %v1317
    %1326 = vset.pattern.permute.xlu0 5
    %1327 = vperm.xlu0 %1326, %v586
    %v1328 = vpop.permute.xlu0 %1327
    %1330 = vset.pattern.permute.xlu0 5
    %1331 = vperm.xlu0 %1330, %v587
    %v1332 = vpop.permute.xlu0 %1331
    %1334 = vset.pattern.permute.xlu0 5
    %1335 = vperm.xlu0 %1334, %v618
    %v1336 = vpop.permute.xlu0 %1335
    %1338 = vset.pattern.permute.xlu0 5
    %1339 = vperm.xlu0 %1338, %v619
    %v1340 = vpop.permute.xlu0 %1339
    %v1342 = vmul.f32 %v1328, %v1322
    %v1343 = vmul.f32 %v1332, %v1323
    %v1344 = vmul.f32 %v1336, %v1324
    %v1345 = vmul.f32 %v1340, %v1325
    %v1346 = vsel %vm369, %v1342, 0.0
    %v1347 = vsel %vm369, %v1343, 0.0
    %v1348 = vadd.f32 %v1346, %v1347
    %v1349 = vrot.slane %v1348, 4
    %v1350 = vadd.f32 %v1348, %v1349
    %v1351 = vrot.slane %v1350, 2
    %v1352 = vadd.f32 %v1350, %v1351
    %v1353 = vrot.slane %v1352, 1
    %v1354 = vadd.f32 %v1352, %v1353
    %v1355 = vsel %vm369, %v1344, 0.0
    %v1356 = vsel %vm369, %v1345, 0.0
    %v1357 = vadd.f32 %v1355, %v1356
    %v1358 = vrot.slane %v1357, 4
    %v1359 = vadd.f32 %v1357, %v1358
    %v1360 = vrot.slane %v1359, 2
    %v1361 = vadd.f32 %v1359, %v1360
    %v1362 = vrot.slane %v1361, 1
    %v1363 = vadd.f32 %v1361, %v1362
    %1364 = vset.pattern.permute.xlu0 6
    %1365 = vperm.xlu0 %1364, %v516
    %v1366 = vpop.permute.xlu0 %1365
    %1368 = vset.pattern.permute.xlu0 6
    %1369 = vperm.xlu0 %1368, %v517
    %v1370 = vpop.permute.xlu0 %1369
    %1372 = vset.pattern.permute.xlu0 6
    %1373 = vperm.xlu0 %1372, %v548
    %v1374 = vpop.permute.xlu0 %1373
    %1376 = vset.pattern.permute.xlu0 6
    %1377 = vperm.xlu0 %1376, %v549
    %v1378 = vpop.permute.xlu0 %1377
    %v1380 = vlaneseq
    %v1381 = vshrl.u32 %v1380, 7
    %v1382 = vsub.s32 6, %v1381
    %v1383 = vrot.slane %v490, %v1382
    %v1384 = vlaneseq
    %v1385 = vshrl.u32 %v1384, 7
    %v1386 = vsub.s32 6, %v1385
    %v1387 = vrot.slane %v491, %v1386
    %v1388 = vmul.f32 %v1366, %v1383
    %v1389 = vmul.f32 %v1370, %v1383
    %v1390 = vmul.f32 %v1374, %v1387
    %v1391 = vmul.f32 %v1378, %v1387
    %v1392 = vmul.f32 %v873, %v1322
    %v1393 = vmul.f32 %v875, %v1323
    %v1394 = vmul.f32 %v905, %v1324
    %v1395 = vmul.f32 %v907, %v1325
    %v1396 = vadd.f32 %v1392, %v1388
    %v1397 = vadd.f32 %v1393, %v1389
    %v1398 = vadd.f32 %v1394, %v1390
    %v1399 = vadd.f32 %v1395, %v1391
    %1400 = vset.pattern.permute.xlu0 6
    %1401 = vperm.xlu0 %1400, %v586
    %v1402 = vpop.permute.xlu0 %1401
    %1404 = vset.pattern.permute.xlu0 6
    %1405 = vperm.xlu0 %1404, %v587
    %v1406 = vpop.permute.xlu0 %1405
    %1408 = vset.pattern.permute.xlu0 6
    %1409 = vperm.xlu0 %1408, %v618
    %v1410 = vpop.permute.xlu0 %1409
    %1412 = vset.pattern.permute.xlu0 6
    %1413 = vperm.xlu0 %1412, %v619
    %v1414 = vpop.permute.xlu0 %1413
    %v1416 = vmul.f32 %v1402, %v1396
    %v1417 = vmul.f32 %v1406, %v1397
    %v1418 = vmul.f32 %v1410, %v1398
    %v1419 = vmul.f32 %v1414, %v1399
    %v1420 = vsel %vm369, %v1416, 0.0
    %v1421 = vsel %vm369, %v1417, 0.0
    %v1422 = vadd.f32 %v1420, %v1421
    %v1423 = vrot.slane %v1422, 4
    %v1424 = vadd.f32 %v1422, %v1423
    %v1425 = vrot.slane %v1424, 2
    %v1426 = vadd.f32 %v1424, %v1425
    %v1427 = vrot.slane %v1426, 1
    %v1428 = vadd.f32 %v1426, %v1427
    %v1429 = vsel %vm369, %v1418, 0.0
    %v1430 = vsel %vm369, %v1419, 0.0
    %v1431 = vadd.f32 %v1429, %v1430
    %v1432 = vrot.slane %v1431, 4
    %v1433 = vadd.f32 %v1431, %v1432
    %v1434 = vrot.slane %v1433, 2
    %v1435 = vadd.f32 %v1433, %v1434
    %v1436 = vrot.slane %v1435, 1
    %v1437 = vadd.f32 %v1435, %v1436
    %1438 = vset.pattern.permute.xlu0 7
    %1439 = vperm.xlu0 %1438, %v516
    %v1440 = vpop.permute.xlu0 %1439
    %1442 = vset.pattern.permute.xlu0 7
    %1443 = vperm.xlu0 %1442, %v517
    %v1444 = vpop.permute.xlu0 %1443
    %1446 = vset.pattern.permute.xlu0 7
    %1447 = vperm.xlu0 %1446, %v548
    %v1448 = vpop.permute.xlu0 %1447
    %1450 = vset.pattern.permute.xlu0 7
    %1451 = vperm.xlu0 %1450, %v549
    %v1452 = vpop.permute.xlu0 %1451
    %v1454 = vlaneseq
    %v1455 = vshrl.u32 %v1454, 7
    %v1456 = vsub.s32 7, %v1455
    %v1457 = vrot.slane %v490, %v1456
    %v1458 = vlaneseq
    %v1459 = vshrl.u32 %v1458, 7
    %v1460 = vsub.s32 7, %v1459
    %v1461 = vrot.slane %v491, %v1460
    %v1462 = vmul.f32 %v1440, %v1457
    %v1463 = vmul.f32 %v1444, %v1457
    %v1464 = vmul.f32 %v1448, %v1461
    %v1465 = vmul.f32 %v1452, %v1461
    %v1466 = vmul.f32 %v877, %v1396
    %v1467 = vmul.f32 %v879, %v1397
    %v1468 = vmul.f32 %v909, %v1398
    %v1469 = vmul.f32 %v911, %v1399
    %v1470 = vadd.f32 %v1466, %v1462
    %v1471 = vadd.f32 %v1467, %v1463
    %v1472 = vadd.f32 %v1468, %v1464
    %v1473 = vadd.f32 %v1469, %v1465
    %1474 = vset.pattern.permute.xlu0 7
    %1475 = vperm.xlu0 %1474, %v586
    %v1476 = vpop.permute.xlu0 %1475
    %1478 = vset.pattern.permute.xlu0 7
    %1479 = vperm.xlu0 %1478, %v587
    %v1480 = vpop.permute.xlu0 %1479
    %1482 = vset.pattern.permute.xlu0 7
    %1483 = vperm.xlu0 %1482, %v618
    %v1484 = vpop.permute.xlu0 %1483
    %1486 = vset.pattern.permute.xlu0 7
    %1487 = vperm.xlu0 %1486, %v619
    %v1488 = vpop.permute.xlu0 %1487
    %v1490 = vmul.f32 %v1476, %v1470
    %v1491 = vmul.f32 %v1480, %v1471
    %v1492 = vmul.f32 %v1484, %v1472
    %v1493 = vmul.f32 %v1488, %v1473
    %v1494 = vsel %vm369, %v1490, 0.0
    %v1495 = vsel %vm369, %v1491, 0.0
    %v1496 = vadd.f32 %v1494, %v1495
    %v1497 = vrot.slane %v1496, 4
    %v1498 = vadd.f32 %v1496, %v1497
    %v1499 = vrot.slane %v1498, 2
    %v1500 = vadd.f32 %v1498, %v1499
    %v1501 = vrot.slane %v1500, 1
    %v1502 = vadd.f32 %v1500, %v1501
    %v1503 = vsel %vm369, %v1492, 0.0
    %v1504 = vsel %vm369, %v1493, 0.0
    %v1505 = vadd.f32 %v1503, %v1504
    %v1506 = vrot.slane %v1505, 4
    %v1507 = vadd.f32 %v1505, %v1506
    %v1508 = vrot.slane %v1507, 2
    %v1509 = vadd.f32 %v1507, %v1508
    %v1510 = vrot.slane %v1509, 1
    %v1511 = vadd.f32 %v1509, %v1510
    %v1512 = vsel %vm427, %v984, %v1058
    %v1513 = vsel %vm427, %v993, %v1067
    %vm1514 = vcmask 1041408
    %v1515 = vsel %vm1514, %v1512, %v1132
    %v1516 = vsel %vm1514, %v1513, %v1141
    %v1517 = vsel %vm233, %v1515, %v1206
    %v1518 = vsel %vm233, %v1516, %v1215
    %vm1519 = vcmask 1043456
    %v1520 = vsel %vm1519, %v1517, %v1280
    %v1521 = vsel %vm1519, %v1518, %v1289
    %v1522 = vsel %vm306, %v1520, %v1354
    %v1523 = vsel %vm306, %v1521, %v1363
    %v1524 = vsel %vm282, %v1522, %v1428
    %v1525 = vsel %vm282, %v1523, %v1437
    %v1526 = vsel %vm258, %v1524, %v1502
    %v1527 = vsel %vm258, %v1525, %v1511
    %v1528 = vld [vmem:[#allocation16] sm:$0x1]
    %v1530 = vlaneseq
    %v1531 = vshrl.u32 %v1530, 7
    %v1532 = vsub.s32 0, %v1531
    %v1533 = vrot.slane %v1528, %v1532
    %v1535 = vmul.f32 %v334, %v1533
    %v1536 = vmul.f32 %v335, %v1533
    %v1537 = vadd.f32 %v1526, %v1535
    %v1538 = vadd.f32 %v1527, %v1536
    %v1539 = vmul.f32 %v221, 0.5
    %v1540 = vmul.f32 %v224, 0.5
    %v1541 = vtanh.pop %v1539
    %v1542 = vtanh.pop %v1540
    %v1543 = vadd.f32 %v1541, 1.0
    %v1544 = vadd.f32 %v1542, 1.0
    %v1545 = vmul.f32 %v1543, 0.5
    %v1546 = vmul.f32 %v1544, 0.5
    %v1547 = vmul.f32 %v221, %v1545
    %v1548 = vmul.f32 %v224, %v1546
    %1551 = vrot.lane.b32.xlu0 %v1547, 64
    %v1552 = vpop.permute.xlu0 %1551
    %1553 = vrot.lane.b32.xlu0 %v1548, 64
    %v1554 = vpop.permute.xlu0 %1553
    %v1557 = vmul.f32 %v1537, %v1552
    %v1558 = vmul.f32 %v1538, %v1554
    %v1559 = vpack.c.bf16 %v1558, %v1557
    %v1560 = vld [vmem:[#allocation17] sm:$0xf]
    %v1561 = vld [vmem:[#allocation17 + $0x4] sm:$0xf]
    %v1562 = vld [vmem:[#allocation17 + $0x8] sm:$0xf]
    %v1563 = vld [vmem:[#allocation17 + $0xc] sm:$0xf]
    %v1564 = vld [vmem:[#allocation17 + $0x10] sm:$0xf]
    %v1565 = vld [vmem:[#allocation17 + $0x14] sm:$0xf]
    %v1566 = vld [vmem:[#allocation17 + $0x18] sm:$0xf]
    %v1567 = vld [vmem:[#allocation17 + $0x1c] sm:$0xf]
    %v1576 = vunpack.c.l.b16 %v1560
    %v1577 = vunpack.c.l.b16 %v1561
    %v1578 = vunpack.c.l.b16 %v1562
    %v1579 = vunpack.c.l.b16 %v1563
    %v1580 = vunpack.c.l.b16 %v1564
    %v1581 = vunpack.c.l.b16 %v1565
    %v1582 = vunpack.c.l.b16 %v1566
    %v1583 = vunpack.c.l.b16 %v1567
    %v1584 = vpack.c.b16 %v1577, %v1576
    %v1585 = vpack.c.b16 %v1579, %v1578
    %v1586 = vpack.c.b16 %v1581, %v1580
    %v1587 = vpack.c.b16 %v1583, %v1582
    %v1593 = vsel %vm369, %v1559, 0
    %1595 = vmatprep.subr.bf16.mxu0 0
    %1596 = vmatpush1.bf16.msra.mxu0 %v1584
    %1597 = vmatprep.subr.bf16.mxu0 0
    %1598 = vmatpush1.bf16.msra.mxu0 %v1585
    %1599 = vmatprep.subr.bf16.mxu0 0
    %1600 = vmatpush1.bf16.msra.mxu0 %v1586
    %1601 = vmatprep.subr.bf16.mxu0 0
    %1602 = vmatpush1.bf16.msra.mxu0 %v1587
    %1603 = vmatprep.subr.bf16.mxu0 0
    %1604 = vmatpush1.bf16.msra.mxu0 0
    %1605 = vmatprep.subr.bf16.mxu0 0
    %1606 = vmatpush1.bf16.msra.mxu0 0
    %1607 = vmatprep.subr.bf16.mxu0 0
    %1608 = vmatpush1.bf16.msra.mxu0 0
    %1609 = vmatprep.subr.bf16.mxu0 0
    %1610 = vmatpush1.bf16.msra.mxu0 0
    %1611 = vmatprep.subr.bf16.mxu0 0
    %1612 = vmatpush1.bf16.msra.mxu0 0
    %1613 = vmatprep.subr.bf16.mxu0 0
    %1614 = vmatpush1.bf16.msra.mxu0 0
    %1615 = vmatprep.subr.bf16.mxu0 0
    %1616 = vmatpush1.bf16.msra.mxu0 0
    %1617 = vmatprep.subr.bf16.mxu0 0
    %1618 = vmatpush1.bf16.msra.mxu0 0
    %1619 = vmatprep.subr.bf16.mxu0 0
    %1620 = vmatpush1.bf16.msra.mxu0 0
    %1621 = vmatprep.subr.bf16.mxu0 0
    %1622 = vmatpush1.bf16.msra.mxu0 0
    %1623 = vmatprep.subr.bf16.mxu0 0
    %1624 = vmatpush1.bf16.msra.mxu0 0
    %1625 = vmatprep.subr.bf16.mxu0 0
    %1626 = vmatpush1.bf16.msra.mxu0 0
    %1627 = vmatprep.mubr.bf16.mxu0 0
    %1628 = vmatmul.mubr.bf16.gmra.mrb[0].mxu0 %v1593
    %v1629 = vpop.f32.mrb[0].mxu0
    %v1630 = vadd.f32 0.0, %v1629
    %v1631 = vpop.f32.mrb[0].mxu0
    %v1632 = vpop.f32.mrb[0].mxu0
    %v1633 = vadd.f32 0.0, %v1632
    %v1634 = vpop.f32.mrb[0].mxu0
    %1635 = vdwg.mxu0
    %1636 = vst.msk [vmem:[#allocation19] sm:$0xff] %vm182, %v1630
    %1637 = vst.msk [vmem:[#allocation19 + $0x8] sm:$0xff] %vm182, %v1633
    // Predicated region
    $region82: #{mamba_forward.1} parent=1 // pred_check
      _
    $region83: #{mamba_forward.1} parent=1 // pred_check_branch
      %1639 = sbr.rel (0) target = $region85
    $region84: #{mamba_forward.1} parent=1 // pred_region
      %s1641 = ssub.s32 256, 256
      %1642 = vsyncadd [#allocation4], %s1641
      %s1643 = sshll.u32 [#allocation19], 4
      %s1644 = int_to_ptr.vmem [resolvable:$true] %s1643
      %1649 = dma.vmem_to_hbm [thread:$0]  %s1644, 256, %s10, [#allocation4], 128, 128, 8
    $region85: #{mamba_forward.1} parent=1 // pred_fallthru
      _
    // Predicated region
    $region86: #{mamba_forward.1} parent=1 // pred_check
      _
    $region87: #{mamba_forward.1} parent=1 // pred_check_branch
      %1651 = sbr.rel (0) target = $region89
    $region88: #{mamba_forward.1} parent=1 // pred_region
      %1652 = dma.done [#allocation4], 256
    $region89: #{mamba_forward.1} parent=1 // pred_fallthru
      _
    %1653 = vsyncpa [#allocation3], 1
    %1654 = vsyncpa [#allocation6], 1
    %1655 = vsyncpa [#allocation9], 1
    %1656 = vsyncpa [#allocation12], 1
    %1657 = vsyncpa [#allocation15], 1
    %1658 = vsyncpa [#allocation18], 1
    %1659 = vsyncpa [#allocation4], 1

</llo_original>
